<compile_context>
chip_gen: v6e
topology: v6e:2x2x1
jax: 0.10.0
libtpu: 0.0.40
codegen_flags: <defaults>
</compile_context>

<pallas_src>
import jax
import jax.numpy as jnp
from jax.experimental import pallas as pl
from jax.experimental.pallas import tpu as pltpu


def _round_up(x, m):
    return (x + m - 1) // m * m


def _fcn_kernel(x_ref, w1_ref, b1_ref, m1_ref, w2_ref, b2_ref, m2_ref,
                w3_ref, b3_ref, o_ref, acc_ref):
    """K-tiled layer1 accumulate; epilogue does relu/dropout/layer2/relu/dropout/layer3."""
    k = pl.program_id(0)

    @pl.when(k == 0)
    def _init():
        acc_ref[...] = jnp.zeros_like(acc_ref)

    # Layer-1 partial product for this contraction tile: bf16 x bf16 -> f32 acc (MXU).
    acc_ref[...] += jnp.dot(x_ref[...], w1_ref[...],
                            preferred_element_type=jnp.float32)

    @pl.when(k == pl.num_programs(0) - 1)
    def _finalize():
        # Bias + ReLU + dropout-1 (masks are pre-scaled by 1/(1-p)), all f32 on the VPU.
        h = jnp.maximum(acc_ref[...] + b1_ref[...], 0.0)
        h = h * m1_ref[...]
        # Layer 2 (tiny) + ReLU + dropout-2.
        h = jnp.dot(h, w2_ref[...], preferred_element_type=jnp.float32) + b2_ref[...]
        h = jnp.maximum(h, 0.0)
        h = h * m2_ref[...]
        # Layer 3 (tiny).
        y = jnp.dot(h, w3_ref[...], preferred_element_type=jnp.float32) + b3_ref[...]
        o_ref[...] = y.astype(o_ref.dtype)


def prepare_params(params, *, num_classes, tile_k=1024):
    """One-time prep: PyTorch (out,in) weights -> transposed, zero-padded, bf16 W1.

    Hoisted out of the per-call path so no transpose/cast runs on the forward
    critical path.
    """
    (w1, b1), (w2, b2), (w3, b3) = params
    hidden, in_features = w1.shape
    assert w2.shape == (num_classes, hidden)
    assert w3.shape == (num_classes, num_classes)

    # 256-aligned contraction tile (MXU-friendly on v5e/v6e/v7x), sized << v7x VMEM.
    tk = int(min(tile_k, _round_up(in_features, 256)))
    tk = _round_up(tk, 256)
    k_padded = _round_up(in_features, tk)
    hidden_p = _round_up(hidden, 128)
    classes_p = _round_up(num_classes, 128)

    w1t = jnp.zeros((k_padded, hidden_p), jnp.bfloat16)
    w1t = w1t.at[:in_features, :hidden].set(w1.T.astype(jnp.bfloat16))
    b1p = jnp.zeros((1, hidden_p), jnp.float32).at[0, :hidden].set(b1)

    w2t = jnp.zeros((hidden_p, classes_p), jnp.float32)
    w2t = w2t.at[:hidden, :num_classes].set(w2.T)
    b2p = jnp.zeros((1, classes_p), jnp.float32).at[0, :num_classes].set(b2)

    w3t = jnp.zeros((classes_p, classes_p), jnp.float32)
    w3t = w3t.at[:num_classes, :num_classes].set(w3.T)
    b3p = jnp.zeros((1, classes_p), jnp.float32).at[0, :num_classes].set(b3)

    return dict(w1t=w1t, b1=b1p, w2t=w2t, b2=b2p, w3t=w3t, b3=b3p,
                in_features=in_features, k_padded=k_padded, tile_k=tk,
                hidden=hidden, hidden_p=hidden_p,
                num_classes=num_classes, classes_p=classes_p)


def fully_connected_double_drop(x_nchw, prepped, dropout_key, *, drop_p=0.5):
    """Training-mode forward. x_nchw: (B, C, H, W) f32. Returns (B, num_classes) f32."""
    B = x_nchw.shape[0]
    x2d = x_nchw.reshape(B, -1)  # == torch x.view(batch_size, -1)
    assert x2d.shape[1] == prepped["in_features"]

    tk = prepped["tile_k"]
    K_p = prepped["k_padded"]
    hidden_p = prepped["hidden_p"]
    classes_p = prepped["classes_p"]
    num_classes = prepped["num_classes"]
    B_p = _round_up(max(B, 8), 8)

    # Pad activations to (B_p, K_p) and cast to bf16 for the MXU.
    x_p = jnp.zeros((B_p, K_p), jnp.bfloat16)
    x_p = x_p.at[:B, :x2d.shape[1]].set(x2d.astype(jnp.bfloat16))

    # Dropout masks in scaled-keep form (0 or 1/(1-p)).  Generated with the standard
    # JAX PRNG so the kernel has no TPU-PRNG dependency; vary `dropout_key` per step.
    # TODO(synk): masks will not bit-match torch's RNG stream (distribution matches).
    if drop_p >= 1.0:
        mask1 = jnp.zeros((B_p, hidden_p), jnp.float32)
        mask2 = jnp.zeros((B_p, classes_p), jnp.float32)
    elif drop_p <= 0.0:
        mask1 = jnp.ones((B_p, hidden_p), jnp.float32)
        mask2 = jnp.ones((B_p, classes_p), jnp.float32)
    else:
        k1, k2 = jax.random.split(dropout_key)
        scale = 1.0 / (1.0 - drop_p)
        mask1 = jax.random.bernoulli(k1, 1.0 - drop_p,
                                     (B_p, hidden_p)).astype(jnp.float32) * scale
        mask2 = jax.random.bernoulli(k2, 1.0 - drop_p,
                                     (B_p, classes_p)).astype(jnp.float32) * scale

    w1t, b1 = prepped["w1t"], prepped["b1"]
    w2t, b2 = prepped["w2t"], prepped["b2"]
    w3t, b3 = prepped["w3t"], prepped["b3"]

    n_k = K_p // tk

    flops = 2 * B_p * (K_p * hidden_p + hidden_p * classes_p + classes_p * classes_p)
    bytes_accessed = (x_p.nbytes + w1t.nbytes + b1.nbytes + mask1.nbytes
                      + w2t.nbytes + b2.nbytes + mask2.nbytes
                      + w3t.nbytes + b3.nbytes + B_p * classes_p * 4)

    out_p = pl.pallas_call(
        _fcn_kernel,
        out_shape=jax.ShapeDtypeStruct((B_p, classes_p), jnp.float32),
        grid=(n_k,),
        in_specs=[
            pl.BlockSpec((B_p, tk), lambda k: (0, k)),                 # x tile
            pl.BlockSpec((tk, hidden_p), lambda k: (k, 0)),            # w1 tile (bf16)
            pl.BlockSpec((1, hidden_p), lambda k: (0, 0)),             # b1 (resident)
            pl.BlockSpec((B_p, hidden_p), lambda k: (0, 0)),           # dropout mask 1
            pl.BlockSpec((hidden_p, classes_p), lambda k: (0, 0)),     # w2^T
            pl.BlockSpec((1, classes_p), lambda k: (0, 0)),            # b2
            pl.BlockSpec((B_p, classes_p), lambda k: (0, 0)),          # dropout mask 2
            pl.BlockSpec((classes_p, classes_p), lambda k: (0, 0)),    # w3^T
            pl.BlockSpec((1, classes_p), lambda k: (0, 0)),            # b3
        ],
        out_specs=pl.BlockSpec((B_p, classes_p), lambda k: (0, 0)),
        scratch_shapes=[pltpu.VMEM((B_p, hidden_p), jnp.float32)],     # layer-1 f32 acc
        compiler_params=pltpu.CompilerParams(
            dimension_semantics=("arbitrary",),
            vmem_limit_bytes=32 * 1024 * 1024,
        ),
        cost_estimate=pl.CostEstimate(
            flops=int(flops), transcendentals=0, bytes_accessed=int(bytes_accessed)),
    )(x_p, w1t, b1, mask1, w2t, b2, mask2, w3t, b3)

    return out_p[:B, :num_classes]


def init_params(key, in_features, hidden, num_classes):
    """Deterministic nn.Linear-style init: U(-1/sqrt(fan_in), 1/sqrt(fan_in))."""
    def linear(key, fan_in, fan_out):
        kw, kb = jax.random.split(key)
        bound = 1.0 / jnp.sqrt(float(fan_in))
        w = jax.random.uniform(kw, (fan_out, fan_in), jnp.float32, -bound, bound)
        b = jax.random.uniform(kb, (fan_out,), jnp.float32, -bound, bound)
        return w, b

    k1, k2, k3 = jax.random.split(key, 3)
    return (
        linear(k1, in_features, hidden),
        linear(k2, hidden, num_classes),
        linear(k3, num_classes, num_classes),
    )


if __name__ == "__main__":
    # Small shapes consistent with the module's structure:
    # original: in = 224*224*3, hidden = 224*224//64, classes = 200.
    # scaled:   spatial=32 -> in = 3*32*32 = 3072, hidden = 32*32//64 = 16.
    batch = 8
    channels = 3
    spatial = 32
    num_classes = 200
    drop_p = 0.5

    in_features = channels * spatial * spatial
    hidden = (spatial * spatial) // 64

    key = jax.random.PRNGKey(0)
    kx, kp, kd = jax.random.split(key, 3)

    x = jax.random.normal(kx, (batch, channels, spatial, spatial), jnp.float32)
    params = init_params(kp, in_features, hidden, num_classes)

    # One-time parameter prep (transpose / pad / bf16-cast) — off the per-call path.
    prepped = prepare_params(params, num_classes=num_classes, tile_k=1024)

    out = fully_connected_double_drop(x, prepped, kd, drop_p=drop_p)
    out = jax.block_until_ready(out)

    assert out.shape == (batch, num_classes), out.shape
    assert out.dtype == jnp.float32
    assert bool(jnp.all(jnp.isfinite(out)))
    print("KERNEL_OK")
</pallas_src>

<mosaic_0001>
module attributes {stable_mosaic.version = 11 : i64} {
  func.func @_fcn_kernel(%arg0: i32, %arg1: memref<8x1024xbf16, #tpu.memory_space<vmem>>, %arg2: memref<1024x128xbf16, #tpu.memory_space<vmem>>, %arg3: memref<1x128xf32, #tpu.memory_space<vmem>>, %arg4: memref<8x128xf32, #tpu.memory_space<vmem>>, %arg5: memref<128x256xf32, #tpu.memory_space<vmem>>, %arg6: memref<1x256xf32, #tpu.memory_space<vmem>>, %arg7: memref<8x256xf32, #tpu.memory_space<vmem>>, %arg8: memref<256x256xf32, #tpu.memory_space<vmem>>, %arg9: memref<1x256xf32, #tpu.memory_space<vmem>>, %arg10: memref<8x256xf32, #tpu.memory_space<vmem>>, %arg11: memref<8x128xf32, #tpu.memory_space<vmem>>) attributes {dimension_semantics = [#tpu.dimension_semantics<arbitrary>], iteration_bounds = array<i64: 3>, scalar_prefetch = 0 : i64, scratch_operands = 1 : i64, tpu.core_type = #tpu.core_type<tc>, window_params = [{transform_indices = @transform_0, window_bounds = array<i64: 8, 1024>}, {transform_indices = @transform_1, window_bounds = array<i64: 1024, 128>}, {pipeline_mode = #tpu.pipeline_mode<synchronous>, transform_indices = @transform_2, window_bounds = array<i64: 1, 128>}, {pipeline_mode = #tpu.pipeline_mode<synchronous>, transform_indices = @transform_3, window_bounds = array<i64: 8, 128>}, {pipeline_mode = #tpu.pipeline_mode<synchronous>, transform_indices = @transform_4, window_bounds = array<i64: 128, 256>}, {pipeline_mode = #tpu.pipeline_mode<synchronous>, transform_indices = @transform_5, window_bounds = array<i64: 1, 256>}, {pipeline_mode = #tpu.pipeline_mode<synchronous>, transform_indices = @transform_6, window_bounds = array<i64: 8, 256>}, {pipeline_mode = #tpu.pipeline_mode<synchronous>, transform_indices = @transform_7, window_bounds = array<i64: 256, 256>}, {pipeline_mode = #tpu.pipeline_mode<synchronous>, transform_indices = @transform_8, window_bounds = array<i64: 1, 256>}, {pipeline_mode = #tpu.pipeline_mode<synchronous>, transform_indices = @transform_9, window_bounds = array<i64: 8, 256>}]} {
    %c0_i32 = arith.constant 0 : i32
    %0 = arith.cmpi eq, %arg0, %c0_i32 : i32
    %1 = arith.extui %0 : i1 to i32
    %c0_i32_0 = arith.constant 0 : i32
    %2 = arith.cmpi ne, %1, %c0_i32_0 : i32
    scf.if %2 {
      %cst_9 = arith.constant 0.000000e+00 : f32
      %12 = vector.broadcast %cst_9 : f32 to vector<8x128xf32>
      %c0_10 = arith.constant 0 : index
      %c0_11 = arith.constant 0 : index
      %13 = vector.load %arg11[%c0_10, %c0_11] : memref<8x128xf32, #tpu.memory_space<vmem>>, vector<8x128xf32>
      tpu.vector_store %arg11[%c0_10, %c0_11], %12 {strides = array<i32>} : memref<8x128xf32, #tpu.memory_space<vmem>>, vector<8x128xf32>,
    } else {
    }
    %c0 = arith.constant 0 : index
    %c0_1 = arith.constant 0 : index
    %3 = vector.load %arg11[%c0, %c0_1] : memref<8x128xf32, #tpu.memory_space<vmem>>, vector<8x128xf32>
    %c0_2 = arith.constant 0 : index
    %c0_3 = arith.constant 0 : index
    %4 = vector.load %arg1[%c0_2, %c0_3] : memref<8x1024xbf16, #tpu.memory_space<vmem>>, vector<8x1024xbf16>
    %c0_4 = arith.constant 0 : index
    %c0_5 = arith.constant 0 : index
    %5 = vector.load %arg2[%c0_4, %c0_5] : memref<1024x128xbf16, #tpu.memory_space<vmem>>, vector<1024x128xbf16>
    %cst = arith.constant dense<0.000000e+00> : vector<8x128xf32>
    %6 = tpu.matmul %4, %5, %cst {dimension_numbers = #tpu.dot_dimension_numbers<[1], [0], [0], [1], [0, 0, 1, 1], [], []>} : vector<8x1024xbf16>, vector<1024x128xbf16>, vector<8x128xf32> -> vector<8x128xf32>
    %7 = arith.addf %3, %6 : vector<8x128xf32>
    %c0_6 = arith.constant 0 : index
    %c0_7 = arith.constant 0 : index
    %8 = vector.load %arg11[%c0_6, %c0_7] : memref<8x128xf32, #tpu.memory_space<vmem>>, vector<8x128xf32>
    tpu.vector_store %arg11[%c0_6, %c0_7], %7 {strides = array<i32>} : memref<8x128xf32, #tpu.memory_space<vmem>>, vector<8x128xf32>,
    %c2_i32 = arith.constant 2 : i32
    %9 = arith.cmpi eq, %arg0, %c2_i32 : i32
    %10 = arith.extui %9 : i1 to i32
    %c0_i32_8 = arith.constant 0 : i32
    %11 = arith.cmpi ne, %10, %c0_i32_8 : i32
    scf.if %11 {
      %c0_9 = arith.constant 0 : index
      %c0_10 = arith.constant 0 : index
      %12 = vector.load %arg11[%c0_9, %c0_10] : memref<8x128xf32, #tpu.memory_space<vmem>>, vector<8x128xf32>
      %c0_11 = arith.constant 0 : index
      %c0_12 = arith.constant 0 : index
      %13 = vector.load %arg3[%c0_11, %c0_12] : memref<1x128xf32, #tpu.memory_space<vmem>>, vector<1x128xf32>
      %14 = vector.broadcast %13 : vector<1x128xf32> to vector<8x128xf32>
      %15 = arith.addf %12, %14 : vector<8x128xf32>
      %cst_13 = arith.constant 0.000000e+00 : f32
      %16 = vector.broadcast %cst_13 : f32 to vector<8x128xf32>
      %17 = arith.maximumf %15, %16 : vector<8x128xf32>
      %c0_14 = arith.constant 0 : index
      %c0_15 = arith.constant 0 : index
      %18 = vector.load %arg4[%c0_14, %c0_15] : memref<8x128xf32, #tpu.memory_space<vmem>>, vector<8x128xf32>
      %19 = arith.mulf %17, %18 : vector<8x128xf32>
      %c0_16 = arith.constant 0 : index
      %c0_17 = arith.constant 0 : index
      %20 = vector.load %arg5[%c0_16, %c0_17] : memref<128x256xf32, #tpu.memory_space<vmem>>, vector<128x256xf32>
      %cst_18 = arith.constant dense<0.000000e+00> : vector<8x256xf32>
      %21 = tpu.matmul %19, %20, %cst_18 {dimension_numbers = #tpu.dot_dimension_numbers<[1], [0], [0], [1], [0, 0, 1, 1], [], []>} : vector<8x128xf32>, vector<128x256xf32>, vector<8x256xf32> -> vector<8x256xf32>
      %c0_19 = arith.constant 0 : index
      %c0_20 = arith.constant 0 : index
      %22 = vector.load %arg6[%c0_19, %c0_20] : memref<1x256xf32, #tpu.memory_space<vmem>>, vector<1x256xf32>
      %23 = vector.broadcast %22 : vector<1x256xf32> to vector<8x256xf32>
      %24 = arith.addf %21, %23 : vector<8x256xf32>
      %cst_21 = arith.constant 0.000000e+00 : f32
      %25 = vector.broadcast %cst_21 : f32 to vector<8x256xf32>
      %26 = arith.maximumf %24, %25 : vector<8x256xf32>
      %c0_22 = arith.constant 0 : index
      %c0_23 = arith.constant 0 : index
      %27 = vector.load %arg7[%c0_22, %c0_23] : memref<8x256xf32, #tpu.memory_space<vmem>>, vector<8x256xf32>
      %28 = arith.mulf %26, %27 : vector<8x256xf32>
      %c0_24 = arith.constant 0 : index
      %c0_25 = arith.constant 0 : index
      %29 = vector.load %arg8[%c0_24, %c0_25] : memref<256x256xf32, #tpu.memory_space<vmem>>, vector<256x256xf32>
      %cst_26 = arith.constant dense<0.000000e+00> : vector<8x256xf32>
      %30 = tpu.matmul %28, %29, %cst_26 {dimension_numbers = #tpu.dot_dimension_numbers<[1], [0], [0], [1], [0, 0, 1, 1], [], []>} : vector<8x256xf32>, vector<256x256xf32>, vector<8x256xf32> -> vector<8x256xf32>
      %c0_27 = arith.constant 0 : index
      %c0_28 = arith.constant 0 : index
      %31 = vector.load %arg9[%c0_27, %c0_28] : memref<1x256xf32, #tpu.memory_space<vmem>>, vector<1x256xf32>
      %32 = vector.broadcast %31 : vector<1x256xf32> to vector<8x256xf32>
      %33 = arith.addf %30, %32 : vector<8x256xf32>
      %c0_29 = arith.constant 0 : index
      %c0_30 = arith.constant 0 : index
      %34 = vector.load %arg10[%c0_29, %c0_30] : memref<8x256xf32, #tpu.memory_space<vmem>>, vector<8x256xf32>
      tpu.vector_store %arg10[%c0_29, %c0_30], %33 {strides = array<i32>} : memref<8x256xf32, #tpu.memory_space<vmem>>, vector<8x256xf32>,
    } else {
    }
    return
  }
  func.func @transform_0(%arg0: i32) -> (i32, i32) {
    %c0_i32 = arith.constant 0 : i32
    %c0_i32_0 = arith.constant 0 : i32
    return %c0_i32, %arg0 : i32, i32
  }
  func.func @transform_1(%arg0: i32) -> (i32, i32) {
    %c0_i32 = arith.constant 0 : i32
    %c0_i32_0 = arith.constant 0 : i32
    return %arg0, %c0_i32 : i32, i32
  }
  func.func @transform_2(%arg0: i32) -> (i32, i32) {
    %c0_i32 = arith.constant 0 : i32
    %c0_i32_0 = arith.constant 0 : i32
    %c0_i32_1 = arith.constant 0 : i32
    return %c0_i32, %c0_i32_0 : i32, i32
  }
  func.func @transform_3(%arg0: i32) -> (i32, i32) {
    %c0_i32 = arith.constant 0 : i32
    %c0_i32_0 = arith.constant 0 : i32
    %c0_i32_1 = arith.constant 0 : i32
    return %c0_i32, %c0_i32_0 : i32, i32
  }
  func.func @transform_4(%arg0: i32) -> (i32, i32) {
    %c0_i32 = arith.constant 0 : i32
    %c0_i32_0 = arith.constant 0 : i32
    %c0_i32_1 = arith.constant 0 : i32
    return %c0_i32, %c0_i32_0 : i32, i32
  }
  func.func @transform_5(%arg0: i32) -> (i32, i32) {
    %c0_i32 = arith.constant 0 : i32
    %c0_i32_0 = arith.constant 0 : i32
    %c0_i32_1 = arith.constant 0 : i32
    return %c0_i32, %c0_i32_0 : i32, i32
  }
  func.func @transform_6(%arg0: i32) -> (i32, i32) {
    %c0_i32 = arith.constant 0 : i32
    %c0_i32_0 = arith.constant 0 : i32
    %c0_i32_1 = arith.constant 0 : i32
    return %c0_i32, %c0_i32_0 : i32, i32
  }
  func.func @transform_7(%arg0: i32) -> (i32, i32) {
    %c0_i32 = arith.constant 0 : i32
    %c0_i32_0 = arith.constant 0 : i32
    %c0_i32_1 = arith.constant 0 : i32
    return %c0_i32, %c0_i32_0 : i32, i32
  }
  func.func @transform_8(%arg0: i32) -> (i32, i32) {
    %c0_i32 = arith.constant 0 : i32
    %c0_i32_0 = arith.constant 0 : i32
    %c0_i32_1 = arith.constant 0 : i32
    return %c0_i32, %c0_i32_0 : i32, i32
  }
  func.func @transform_9(%arg0: i32) -> (i32, i32) {
    %c0_i32 = arith.constant 0 : i32
    %c0_i32_0 = arith.constant 0 : i32
    %c0_i32_1 = arith.constant 0 : i32
    return %c0_i32, %c0_i32_0 : i32, i32
  }
}

</mosaic_0001>

<llo_original>
// kernel: tpu_custom_call.1
$region0: #{tpu_custom_call.1}
  #allocation0 [shape = 'u32[]', space=smem, size = 0x4, offset = 0x4, fixed_abs, tag = 'smem constant byte address 0x4 - core index']
  #allocation1 [shape = 'u32[144,128]{1,0:T(1,128)}', space=vmem, size = 0x12000, scoped, tag = 'internal scratch']
  #allocation2 [shape = 'f32[8,128]{1,0:T(8,128)}', space=vmem, size = 0x1000, scoped, tag = 'scratch operand']
  %s0 = inlined_call_operand.hbm [shape: bf16[8,3072], index: 0, kind: input, shape index: {}]
  %s1 = inlined_call_operand.hbm [shape: bf16[3072,128], index: 1, kind: input, shape index: {}]
  %s2 = inlined_call_operand.vmem [shape: f32[1,128], index: 2, kind: input, shape index: {}]
  %s3 = inlined_call_operand.hbm [shape: f32[8,128], index: 3, kind: input, shape index: {}]
  %s4 = inlined_call_operand.hbm [shape: f32[128,256], index: 4, kind: input, shape index: {}]
  %s5 = inlined_call_operand.vmem [shape: f32[1,256], index: 5, kind: input, shape index: {}]
  %s6 = inlined_call_operand.hbm [shape: f32[8,256], index: 6, kind: input, shape index: {}]
  %s7 = inlined_call_operand.hbm [shape: f32[256,256], index: 7, kind: input, shape index: {}]
  %s8 = inlined_call_operand.vmem [shape: f32[1,256], index: 8, kind: input, shape index: {}]
  %s9 = inlined_call_operand.hbm [shape: f32[8,256], index: 9, kind: output, shape index: {}]
  %s10 = sld [smem:[#allocation0]]
  $region101: #{tpu_custom_call.1} parent=0
    _
  %s12 = ssub.s32 1, %s10
  %s13 = scalar_select 0, %s12, %s10
  $region1: #{tpu_custom_call.1} parent=0
    #allocation3 [shape = 'u8[32768]{0}', space=vmem, size = 0x8000, scoped, tag = 'input window, operand 0']
    #allocation4 [shape = 's32[2]{0}', space=sflag, size = 0x8, scoped, tag = 'scoped memory for tpu_custom_call.1']
    #allocation5 [shape = 's32[2]{0}', space=sflag, size = 0x8, scoped, tag = 'scoped memory for tpu_custom_call.1']
    #allocation6 [shape = 'u8[524288]{0}', space=vmem, size = 0x80000, scoped, tag = 'input window, operand 1']
    #allocation7 [shape = 's32[2]{0}', space=sflag, size = 0x8, scoped, tag = 'scoped memory for tpu_custom_call.1']
    #allocation8 [shape = 'u8[4096]{0}', space=vmem, size = 0x1000, scoped, tag = 'input window, operand 3, single buffered']
    #allocation9 [shape = 'u8[131072]{0}', space=vmem, size = 0x20000, scoped, tag = 'input window, operand 4, single buffered']
    #allocation10 [shape = 's32[1]{0}', space=sflag, size = 0x4, scoped, tag = 'scoped memory for tpu_custom_call.1']
    #allocation11 [shape = 'u8[8192]{0}', space=vmem, size = 0x2000, scoped, tag = 'input window, operand 6, single buffered']
    #allocation12 [shape = 'u8[262144]{0}', space=vmem, size = 0x40000, scoped, tag = 'input window, operand 7, single buffered']
    #allocation13 [shape = 's32[1]{0}', space=sflag, size = 0x4, scoped, tag = 'scoped memory for tpu_custom_call.1']
    #allocation14 [shape = 'u8[8192]{0}', space=vmem, size = 0x2000, scoped, tag = 'output window, operand 0, single buffered']
    %14 = vsyncpa [#allocation4], 0
    %s15 = scalar_lea.sflag [#allocation4], 1
    %16 = vsyncpa %s15, 0
    %17 = vsyncpa [#allocation7], 0
    %s18 = scalar_lea.sflag [#allocation7], 1
    %19 = vsyncpa %s18, 0
    %20 = vsyncpa [#allocation10], 0
    %21 = vsyncpa [#allocation13], 0
    %22 = vsyncpa [#allocation5], 0
    loop: start=0, step=1, limit=5
    $region2: #{tpu_custom_call.1} parent=1 // loop_pre_header
      _
    $region3: #{tpu_custom_call.1} parent=1 // loop_header
      %s24 = sphi 0, %s28
      %p25 = scmp.ge.s32.totalorder %s24, 5
      %s34 = sphi 0, %s36
      %s37 = sphi 0, %s34
      %s38 = sphi 0, %s37
      %s54 = sphi 0, %s38
      %s60 = sphi 0, %s62
      %s63 = sphi 0, %s60
      %s64 = sphi 0, %s63
      %s80 = sphi 0, %s64
      %s84 = sphi 0, %s84
      %s86 = sphi 0, %s84
      %s87 = sphi 0, %s86
      %s101 = sphi 0, %s87
      %s105 = sphi 0, %s105
      %s107 = sphi 0, %s105
      %s108 = sphi 0, %s107
      %s122 = sphi 0, %s108
      %s126 = sphi 0, %s126
      %s128 = sphi 0, %s126
      %s129 = sphi 0, %s128
      %s143 = sphi 0, %s129
      %s147 = sphi 0, %s147
      %s149 = sphi 0, %s147
      %s150 = sphi 0, %s149
      %s164 = sphi 0, %s150
      %s168 = sphi 0, %s168
      %s170 = sphi 0, %s168
      %s171 = sphi 0, %s170
      %s185 = sphi 0, %s171
      %s189 = sphi 0, %s189
      %s191 = sphi 0, %s189
      %s192 = sphi 0, %s191
      %s206 = sphi 0, %s192
      %s210 = sphi 0, %s210
      %s212 = sphi 0, %s210
      %s213 = sphi 0, %s212
      %s227 = sphi 0, %s213
      %s231 = sphi 0, %s231
      %s233 = sphi 0, %s231
      %s234 = sphi 0, %s233
      %s248 = sphi 0, %s234
    $region4: #{tpu_custom_call.1} parent=1 // loop_header_branch
      %27 = sbr.rel (%p25) target = $region8
    $region5: #{tpu_custom_call.1} parent=1 // loop_body
      %s29 = ssub.s32 %s24, 1
      %s30 = ssub.s32 %s24, 2
      %s31 = sadd.s32 %s24, 1
      %s32 = ssub.s32 %s24, %s31
      %p33 = scmp.eq.s32.totalorder %s32, 0
      %s35 = sadd.s32 %s34, 1
      %s36 = scalar_select %p33, %s34, %s35
      %p39 = pneg %p33
      %p40 = scmp.eq.s32.totalorder %s24, 2
      %p41 = por %p39, %p40
      %p42 = scmp.ne.s32.totalorder %s34, %s37
      %p43 = scmp.eq.s32.totalorder %s24, 0
      %p44 = por %p42, %p43
      %p45 = scmp.ne.s32.totalorder %s34, %s37
      %p46 = scmp.eq.s32.totalorder %s29, 2
      %p47 = por %p45, %p46
      %p48 = scmp.ne.s32.totalorder %s37, %s38
      %p49 = scmp.eq.s32.totalorder %s29, 0
      %p50 = por %p48, %p49
      %p51 = scmp.ne.s32.totalorder %s37, %s38
      %p52 = scmp.eq.s32.totalorder %s30, 2
      %p53 = por %p51, %p52
      %p55 = scmp.ne.s32.totalorder %s38, %s54
      %p56 = scmp.eq.s32.totalorder %s30, 0
      %p57 = por %p55, %p56
      %s58 = ssub.s32 %s24, %s31
      %p59 = scmp.eq.s32.totalorder %s58, 0
      %s61 = sadd.s32 %s60, 1
      %s62 = scalar_select %p59, %s60, %s61
      %p65 = pneg %p59
      %p66 = scmp.eq.s32.totalorder %s24, 2
      %p67 = por %p65, %p66
      %p68 = scmp.ne.s32.totalorder %s60, %s63
      %p69 = scmp.eq.s32.totalorder %s24, 0
      %p70 = por %p68, %p69
      %p71 = scmp.ne.s32.totalorder %s60, %s63
      %p72 = scmp.eq.s32.totalorder %s29, 2
      %p73 = por %p71, %p72
      %p74 = scmp.ne.s32.totalorder %s63, %s64
      %p75 = scmp.eq.s32.totalorder %s29, 0
      %p76 = por %p74, %p75
      %p77 = scmp.ne.s32.totalorder %s63, %s64
      %p78 = scmp.eq.s32.totalorder %s30, 2
      %p79 = por %p77, %p78
      %p81 = scmp.ne.s32.totalorder %s64, %s80
      %p82 = scmp.eq.s32.totalorder %s30, 0
      %p83 = por %p81, %p82
      %s85 = sadd.s32 %s84, 1
      %p88 = scmp.eq.s32.totalorder %s24, 2
      %p89 = scmp.ne.s32.totalorder %s84, %s86
      %p90 = scmp.eq.s32.totalorder %s24, 0
      %p91 = por %p89, %p90
      %p92 = scmp.ne.s32.totalorder %s84, %s86
      %p93 = scmp.eq.s32.totalorder %s29, 2
      %p94 = por %p92, %p93
      %p95 = scmp.ne.s32.totalorder %s86, %s87
      %p96 = scmp.eq.s32.totalorder %s29, 0
      %p97 = por %p95, %p96
      %p98 = scmp.ne.s32.totalorder %s86, %s87
      %p99 = scmp.eq.s32.totalorder %s30, 2
      %p100 = por %p98, %p99
      %p102 = scmp.ne.s32.totalorder %s87, %s101
      %p103 = scmp.eq.s32.totalorder %s30, 0
      %p104 = por %p102, %p103
      %s106 = sadd.s32 %s105, 1
      %p109 = scmp.eq.s32.totalorder %s24, 2
      %p110 = scmp.ne.s32.totalorder %s105, %s107
      %p111 = scmp.eq.s32.totalorder %s24, 0
      %p112 = por %p110, %p111
      %p113 = scmp.ne.s32.totalorder %s105, %s107
      %p114 = scmp.eq.s32.totalorder %s29, 2
      %p115 = por %p113, %p114
      %p116 = scmp.ne.s32.totalorder %s107, %s108
      %p117 = scmp.eq.s32.totalorder %s29, 0
      %p118 = por %p116, %p117
      %p119 = scmp.ne.s32.totalorder %s107, %s108
      %p120 = scmp.eq.s32.totalorder %s30, 2
      %p121 = por %p119, %p120
      %p123 = scmp.ne.s32.totalorder %s108, %s122
      %p124 = scmp.eq.s32.totalorder %s30, 0
      %p125 = por %p123, %p124
      %s127 = sadd.s32 %s126, 1
      %p130 = scmp.eq.s32.totalorder %s24, 2
      %p131 = scmp.ne.s32.totalorder %s126, %s128
      %p132 = scmp.eq.s32.totalorder %s24, 0
      %p133 = por %p131, %p132
      %p134 = scmp.ne.s32.totalorder %s126, %s128
      %p135 = scmp.eq.s32.totalorder %s29, 2
      %p136 = por %p134, %p135
      %p137 = scmp.ne.s32.totalorder %s128, %s129
      %p138 = scmp.eq.s32.totalorder %s29, 0
      %p139 = por %p137, %p138
      %p140 = scmp.ne.s32.totalorder %s128, %s129
      %p141 = scmp.eq.s32.totalorder %s30, 2
      %p142 = por %p140, %p141
      %p144 = scmp.ne.s32.totalorder %s129, %s143
      %p145 = scmp.eq.s32.totalorder %s30, 0
      %p146 = por %p144, %p145
      %s148 = sadd.s32 %s147, 1
      %p151 = scmp.eq.s32.totalorder %s24, 2
      %p152 = scmp.ne.s32.totalorder %s147, %s149
      %p153 = scmp.eq.s32.totalorder %s24, 0
      %p154 = por %p152, %p153
      %p155 = scmp.ne.s32.totalorder %s147, %s149
      %p156 = scmp.eq.s32.totalorder %s29, 2
      %p157 = por %p155, %p156
      %p158 = scmp.ne.s32.totalorder %s149, %s150
      %p159 = scmp.eq.s32.totalorder %s29, 0
      %p160 = por %p158, %p159
      %p161 = scmp.ne.s32.totalorder %s149, %s150
      %p162 = scmp.eq.s32.totalorder %s30, 2
      %p163 = por %p161, %p162
      %p165 = scmp.ne.s32.totalorder %s150, %s164
      %p166 = scmp.eq.s32.totalorder %s30, 0
      %p167 = por %p165, %p166
      %s169 = sadd.s32 %s168, 1
      %p172 = scmp.eq.s32.totalorder %s24, 2
      %p173 = scmp.ne.s32.totalorder %s168, %s170
      %p174 = scmp.eq.s32.totalorder %s24, 0
      %p175 = por %p173, %p174
      %p176 = scmp.ne.s32.totalorder %s168, %s170
      %p177 = scmp.eq.s32.totalorder %s29, 2
      %p178 = por %p176, %p177
      %p179 = scmp.ne.s32.totalorder %s170, %s171
      %p180 = scmp.eq.s32.totalorder %s29, 0
      %p181 = por %p179, %p180
      %p182 = scmp.ne.s32.totalorder %s170, %s171
      %p183 = scmp.eq.s32.totalorder %s30, 2
      %p184 = por %p182, %p183
      %p186 = scmp.ne.s32.totalorder %s171, %s185
      %p187 = scmp.eq.s32.totalorder %s30, 0
      %p188 = por %p186, %p187
      %s190 = sadd.s32 %s189, 1
      %p193 = scmp.eq.s32.totalorder %s24, 2
      %p194 = scmp.ne.s32.totalorder %s189, %s191
      %p195 = scmp.eq.s32.totalorder %s24, 0
      %p196 = por %p194, %p195
      %p197 = scmp.ne.s32.totalorder %s189, %s191
      %p198 = scmp.eq.s32.totalorder %s29, 2
      %p199 = por %p197, %p198
      %p200 = scmp.ne.s32.totalorder %s191, %s192
      %p201 = scmp.eq.s32.totalorder %s29, 0
      %p202 = por %p200, %p201
      %p203 = scmp.ne.s32.totalorder %s191, %s192
      %p204 = scmp.eq.s32.totalorder %s30, 2
      %p205 = por %p203, %p204
      %p207 = scmp.ne.s32.totalorder %s192, %s206
      %p208 = scmp.eq.s32.totalorder %s30, 0
      %p209 = por %p207, %p208
      %s211 = sadd.s32 %s210, 1
      %p214 = scmp.eq.s32.totalorder %s24, 2
      %p215 = scmp.ne.s32.totalorder %s210, %s212
      %p216 = scmp.eq.s32.totalorder %s24, 0
      %p217 = por %p215, %p216
      %p218 = scmp.ne.s32.totalorder %s210, %s212
      %p219 = scmp.eq.s32.totalorder %s29, 2
      %p220 = por %p218, %p219
      %p221 = scmp.ne.s32.totalorder %s212, %s213
      %p222 = scmp.eq.s32.totalorder %s29, 0
      %p223 = por %p221, %p222
      %p224 = scmp.ne.s32.totalorder %s212, %s213
      %p225 = scmp.eq.s32.totalorder %s30, 2
      %p226 = por %p224, %p225
      %p228 = scmp.ne.s32.totalorder %s213, %s227
      %p229 = scmp.eq.s32.totalorder %s30, 0
      %p230 = por %p228, %p229
      %s232 = sadd.s32 %s231, 1
      %p235 = scmp.eq.s32.totalorder %s24, 2
      %p236 = scmp.ne.s32.totalorder %s231, %s233
      %p237 = scmp.eq.s32.totalorder %s24, 0
      %p238 = por %p236, %p237
      %p239 = scmp.ne.s32.totalorder %s231, %s233
      %p240 = scmp.eq.s32.totalorder %s29, 2
      %p241 = por %p239, %p240
      %p242 = scmp.ne.s32.totalorder %s233, %s234
      %p243 = scmp.eq.s32.totalorder %s29, 0
      %p244 = por %p242, %p243
      %p245 = scmp.ne.s32.totalorder %s233, %s234
      %p246 = scmp.eq.s32.totalorder %s30, 2
      %p247 = por %p245, %p246
      %p249 = scmp.ne.s32.totalorder %s234, %s248
      %p250 = scmp.eq.s32.totalorder %s30, 0
      %p251 = por %p249, %p250
      %p252 = scmp.le.s32.totalorder 1, %s24
      %p253 = scmp.lt.s32.totalorder %s24, 4
      %p254 = pnand %p252, %p253
      %p255 = pneg %p254
      // Predicated region
      $region9: #{tpu_custom_call.1} parent=5 // pred_check
        _
      $region10: #{tpu_custom_call.1} parent=5 // pred_check_branch
        %257 = sbr.rel (%p254) target = $region12
      $region11: #{tpu_custom_call.1} parent=5 // pred_region
        %s258 = ssub.s32 %s24, 1
        // Predicated region
        $region13: #{tpu_custom_call.1} parent=11 // pred_check
          %p259 = pneg %p97
        $region14: #{tpu_custom_call.1} parent=11 // pred_check_branch
          %261 = sbr.rel (%p259) target = $region16
        $region15: #{tpu_custom_call.1} parent=11 // pred_region
          _
        $region16: #{tpu_custom_call.1} parent=11 // pred_fallthru
          _
        // Predicated region
        $region17: #{tpu_custom_call.1} parent=11 // pred_check
          %p262 = pneg %p118
        $region18: #{tpu_custom_call.1} parent=11 // pred_check_branch
          %264 = sbr.rel (%p262) target = $region20
        $region19: #{tpu_custom_call.1} parent=11 // pred_region
          %s266 = ssub.s32 128, 128
          %267 = vsyncadd [#allocation7], %s266
          %s269 = sshll.u32 [#allocation8], 4
          %s270 = int_to_ptr.vmem [resolvable:$true] %s269
          %272 = dma.hbm_to_vmem [thread:$0]  %s3, 128, %s270, [#allocation7]
        $region20: #{tpu_custom_call.1} parent=11 // pred_fallthru
          _
        // Predicated region
        $region21: #{tpu_custom_call.1} parent=11 // pred_check
          %p273 = pneg %p139
        $region22: #{tpu_custom_call.1} parent=11 // pred_check_branch
          %275 = sbr.rel (%p273) target = $region24
        $region23: #{tpu_custom_call.1} parent=11 // pred_region
          %s277 = ssub.s32 4096, 4096
          %278 = vsyncadd [#allocation10], %s277
          %s279 = sshll.u32 [#allocation9], 4
          %s280 = int_to_ptr.vmem [resolvable:$true] %s279
          %285 = dma.hbm_to_vmem [thread:$0]  %s4, 4096, %s280, [#allocation10], 256, 256, 16
        $region24: #{tpu_custom_call.1} parent=11 // pred_fallthru
          _
        // Predicated region
        $region25: #{tpu_custom_call.1} parent=11 // pred_check
          %p286 = pneg %p160
        $region26: #{tpu_custom_call.1} parent=11 // pred_check_branch
          %288 = sbr.rel (%p286) target = $region28
        $region27: #{tpu_custom_call.1} parent=11 // pred_region
          _
        $region28: #{tpu_custom_call.1} parent=11 // pred_fallthru
          _
        // Predicated region
        $region29: #{tpu_custom_call.1} parent=11 // pred_check
          %p289 = pneg %p181
        $region30: #{tpu_custom_call.1} parent=11 // pred_check_branch
          %291 = sbr.rel (%p289) target = $region32
        $region31: #{tpu_custom_call.1} parent=11 // pred_region
          %s293 = ssub.s32 256, 256
          %294 = vsyncadd [#allocation10], %s293
          %s296 = sshll.u32 [#allocation11], 4
          %s297 = int_to_ptr.vmem [resolvable:$true] %s296
          %299 = dma.hbm_to_vmem [thread:$0]  %s6, 256, %s297, [#allocation10]
        $region32: #{tpu_custom_call.1} parent=11 // pred_fallthru
          _
        // Predicated region
        $region33: #{tpu_custom_call.1} parent=11 // pred_check
          %p300 = pneg %p202
        $region34: #{tpu_custom_call.1} parent=11 // pred_check_branch
          %302 = sbr.rel (%p300) target = $region36
        $region35: #{tpu_custom_call.1} parent=11 // pred_region
          %s304 = ssub.s32 8192, 8192
          %305 = vsyncadd [#allocation13], %s304
          %s306 = sshll.u32 [#allocation12], 4
          %s307 = int_to_ptr.vmem [resolvable:$true] %s306
          %312 = dma.hbm_to_vmem [thread:$0]  %s7, 8192, %s307, [#allocation13], 256, 256, 16
        $region36: #{tpu_custom_call.1} parent=11 // pred_fallthru
          _
        // Predicated region
        $region37: #{tpu_custom_call.1} parent=11 // pred_check
          %p313 = pneg %p223
        $region38: #{tpu_custom_call.1} parent=11 // pred_check_branch
          %315 = sbr.rel (%p313) target = $region40
        $region39: #{tpu_custom_call.1} parent=11 // pred_region
          _
        $region40: #{tpu_custom_call.1} parent=11 // pred_fallthru
          _
      $region12: #{tpu_custom_call.1} parent=5 // pred_fallthru
        _
      %p316 = scmp.lt.s32.totalorder %s24, 3
      // Predicated region
      $region41: #{tpu_custom_call.1} parent=5 // pred_check
        %p317 = pneg %p316
      $region42: #{tpu_custom_call.1} parent=5 // pred_check_branch
        %319 = sbr.rel (%p317) target = $region44
      $region43: #{tpu_custom_call.1} parent=5 // pred_region
        // Predicated region
        $region45: #{tpu_custom_call.1} parent=43 // pred_check
          %p320 = pneg %p44
        $region46: #{tpu_custom_call.1} parent=43 // pred_check_branch
          %322 = sbr.rel (%p320) target = $region48
        $region47: #{tpu_custom_call.1} parent=43 // pred_region
          %s323 = sand.u32 %s34, 1
          %s324 = scalar_lea.sflag [#allocation4], %s323
          %s325 = sand.u32 %s34, 1
          %s326 = smul.addr %s325, 32
          %s327 = scalar_lea.vmem [#allocation3], %s326
          %s328 = smul.u32 8, %s24
          %s330 = ssub.s32 512, 512
          %331 = vsyncadd %s324, %s330
          %s332 = smul.addr %s328, 64
          %s333 = scalar_lea.hbm %s0, %s332
          %s335 = sshll.u32 %s327, 4
          %s336 = int_to_ptr.vmem [resolvable:$true] %s335
          %338 = dma.hbm_to_vmem [thread:$0]  %s333, 512, %s336, %s324
        $region48: #{tpu_custom_call.1} parent=43 // pred_fallthru
          _
        // Predicated region
        $region49: #{tpu_custom_call.1} parent=43 // pred_check
          %p339 = pneg %p70
        $region50: #{tpu_custom_call.1} parent=43 // pred_check_branch
          %341 = sbr.rel (%p339) target = $region52
        $region51: #{tpu_custom_call.1} parent=43 // pred_region
          %s342 = sand.u32 %s24, 1
          %s343 = scalar_lea.sflag [#allocation7], %s342
          %s344 = sand.u32 %s60, 1
          %s345 = smul.addr %s344, 512
          %s346 = scalar_lea.vmem [#allocation6], %s345
          %s347 = smul.u32 128, %s24
          %s349 = ssub.s32 8192, 8192
          %350 = vsyncadd %s343, %s349
          %s351 = smul.addr %s347, 64
          %s352 = scalar_lea.hbm %s1, %s351
          %s353 = sshll.u32 %s346, 4
          %s354 = int_to_ptr.vmem [resolvable:$true] %s353
          %359 = dma.hbm_to_vmem [thread:$0]  %s352, 8192, %s354, %s343, 64, 64, 4
        $region52: #{tpu_custom_call.1} parent=43 // pred_fallthru
          _
      $region44: #{tpu_custom_call.1} parent=5 // pred_fallthru
        _
      %p360 = scmp.le.s32.totalorder 1, %s24
      %p361 = scmp.lt.s32.totalorder %s24, 4
      %p362 = pnand %p360, %p361
      %p363 = pneg %p362
      // Predicated region
      $region53: #{tpu_custom_call.1} parent=5 // pred_check
        _
      $region54: #{tpu_custom_call.1} parent=5 // pred_check_branch
        %365 = sbr.rel (%p362) target = $region56
      $region55: #{tpu_custom_call.1} parent=5 // pred_region
        %s366 = ssub.s32 %s24, 1
        %s367 = sand.u32 %s37, 1
        %s368 = scalar_lea.sflag [#allocation4], %s367
        %s369 = sand.u32 %s37, 1
        %s370 = smul.addr %s369, 32
        %s371 = scalar_lea.vmem [#allocation3], %s370
        // Predicated region
        $region57: #{tpu_custom_call.1} parent=55 // pred_check
          %p372 = pneg %p50
        $region58: #{tpu_custom_call.1} parent=55 // pred_check_branch
          %374 = sbr.rel (%p372) target = $region60
        $region59: #{tpu_custom_call.1} parent=55 // pred_region
          %375 = dma.done %s368, 512
        $region60: #{tpu_custom_call.1} parent=55 // pred_fallthru
          _
        %s376 = sand.u32 %s29, 1
        %s377 = scalar_lea.sflag [#allocation7], %s376
        %s378 = sand.u32 %s63, 1
        %s379 = smul.addr %s378, 512
        %s380 = scalar_lea.vmem [#allocation6], %s379
        // Predicated region
        $region61: #{tpu_custom_call.1} parent=55 // pred_check
          %p381 = pneg %p76
        $region62: #{tpu_custom_call.1} parent=55 // pred_check_branch
          %383 = sbr.rel (%p381) target = $region64
        $region63: #{tpu_custom_call.1} parent=55 // pred_region
          %384 = dma.done %s377, 8192
        $region64: #{tpu_custom_call.1} parent=55 // pred_fallthru
          _
        // Predicated region
        $region65: #{tpu_custom_call.1} parent=55 // pred_check
          %p385 = pneg %p118
        $region66: #{tpu_custom_call.1} parent=55 // pred_check_branch
          %387 = sbr.rel (%p385) target = $region68
        $region67: #{tpu_custom_call.1} parent=55 // pred_region
          %388 = dma.done [#allocation7], 128
        $region68: #{tpu_custom_call.1} parent=55 // pred_fallthru
          _
        // Predicated region
        $region69: #{tpu_custom_call.1} parent=55 // pred_check
          %p389 = pneg %p139
        $region70: #{tpu_custom_call.1} parent=55 // pred_check_branch
          %391 = sbr.rel (%p389) target = $region72
        $region71: #{tpu_custom_call.1} parent=55 // pred_region
          %392 = dma.done [#allocation10], 4096
        $region72: #{tpu_custom_call.1} parent=55 // pred_fallthru
          _
        // Predicated region
        $region73: #{tpu_custom_call.1} parent=55 // pred_check
          %p393 = pneg %p181
        $region74: #{tpu_custom_call.1} parent=55 // pred_check_branch
          %395 = sbr.rel (%p393) target = $region76
        $region75: #{tpu_custom_call.1} parent=55 // pred_region
          %396 = dma.done [#allocation10], 256
        $region76: #{tpu_custom_call.1} parent=55 // pred_fallthru
          _
        // Predicated region
        $region77: #{tpu_custom_call.1} parent=55 // pred_check
          %p397 = pneg %p202
        $region78: #{tpu_custom_call.1} parent=55 // pred_check_branch
          %399 = sbr.rel (%p397) target = $region80
        $region79: #{tpu_custom_call.1} parent=55 // pred_region
          %400 = dma.done [#allocation13], 8192
        $region80: #{tpu_custom_call.1} parent=55 // pred_fallthru
          _
        %s401 = sand.u32 %s37, 1
        %s402 = scalar_lea.sflag [#allocation4], %s401
        %s403 = sand.u32 %s37, 1
        %s404 = smul.addr %s403, 32
        %s405 = scalar_lea.vmem [#allocation3], %s404
        %p406 = pneg %p50
        %p407 = pneg %p47
        %s408 = sand.u32 %s29, 1
        %s409 = scalar_lea.sflag [#allocation7], %s408
        %s410 = sand.u32 %s63, 1
        %s411 = smul.addr %s410, 512
        %s412 = scalar_lea.vmem [#allocation6], %s411
        %p413 = pneg %p76
        %p414 = pneg %p73
        %p415 = pneg %p97
        %p416 = pneg %p94
        %p417 = pneg %p118
        %p418 = pneg %p115
        %p419 = pneg %p139
        %p420 = pneg %p136
        %p421 = pneg %p160
        %p422 = pneg %p157
        %p423 = pneg %p181
        %p424 = pneg %p178
        %p425 = pneg %p202
        %p426 = pneg %p199
        %p427 = pneg %p223
        %p428 = pneg %p220
        %p429 = pneg %p244
        %p430 = pneg %p241
        %s431 = smul.u32 8, %s29
        %s432 = smul.u32 128, %s29
        %p434 = scmp.eq.s32.totalorder %s29, 0
        // Predicated region
        $region81: #{tpu_custom_call.1} parent=55 // pred_check
          %p435 = pneg %p434
        $region82: #{tpu_custom_call.1} parent=55 // pred_check_branch
          %437 = sbr.rel (%p435) target = $region84
        $region83: #{tpu_custom_call.1} parent=55 // pred_region
          %438 = vst [vmem:[#allocation2] sm:$0xff] 0.0
        $region84: #{tpu_custom_call.1} parent=55 // pred_fallthru
          _
        %v439 = vld [vmem:[#allocation2] sm:$0xff]
        %v440 = vld [vmem:[%s371] sm:$0xff]
        %v441 = vld [vmem:[%s371 + $0x8] sm:$0xff]
        %v442 = vld [vmem:[%s371 + $0x10] sm:$0xff]
        %v443 = vld [vmem:[%s371 + $0x18] sm:$0xff]
        %v444 = vld [vmem:[%s380] sm:$0xf]
        %v445 = vld [vmem:[%s380 + $0x4] sm:$0xf]
        %v446 = vld [vmem:[%s380 + $0x8] sm:$0xf]
        %v447 = vld [vmem:[%s380 + $0xc] sm:$0xf]
        %v448 = vld [vmem:[%s380 + $0x10] sm:$0xf]
        %v449 = vld [vmem:[%s380 + $0x14] sm:$0xf]
        %v450 = vld [vmem:[%s380 + $0x18] sm:$0xf]
        %v451 = vld [vmem:[%s380 + $0x1c] sm:$0xf]
        %v452 = vld [vmem:[%s380 + $0x20] sm:$0xf]
        %v453 = vld [vmem:[%s380 + $0x24] sm:$0xf]
        %v454 = vld [vmem:[%s380 + $0x28] sm:$0xf]
        %v455 = vld [vmem:[%s380 + $0x2c] sm:$0xf]
        %v456 = vld [vmem:[%s380 + $0x30] sm:$0xf]
        %v457 = vld [vmem:[%s380 + $0x34] sm:$0xf]
        %v458 = vld [vmem:[%s380 + $0x38] sm:$0xf]
        %v459 = vld [vmem:[%s380 + $0x3c] sm:$0xf]
        %v460 = vld [vmem:[%s380 + $0x40] sm:$0xf]
        %v461 = vld [vmem:[%s380 + $0x44] sm:$0xf]
        %v462 = vld [vmem:[%s380 + $0x48] sm:$0xf]
        %v463 = vld [vmem:[%s380 + $0x4c] sm:$0xf]
        %v464 = vld [vmem:[%s380 + $0x50] sm:$0xf]
        %v465 = vld [vmem:[%s380 + $0x54] sm:$0xf]
        %v466 = vld [vmem:[%s380 + $0x58] sm:$0xf]
        %v467 = vld [vmem:[%s380 + $0x5c] sm:$0xf]
        %v468 = vld [vmem:[%s380 + $0x60] sm:$0xf]
        %v469 = vld [vmem:[%s380 + $0x64] sm:$0xf]
        %v470 = vld [vmem:[%s380 + $0x68] sm:$0xf]
        %v471 = vld [vmem:[%s380 + $0x6c] sm:$0xf]
        %v472 = vld [vmem:[%s380 + $0x70] sm:$0xf]
        %v473 = vld [vmem:[%s380 + $0x74] sm:$0xf]
        %v474 = vld [vmem:[%s380 + $0x78] sm:$0xf]
        %v475 = vld [vmem:[%s380 + $0x7c] sm:$0xf]
        %v476 = vld [vmem:[%s380 + $0x80] sm:$0xf]
        %v477 = vld [vmem:[%s380 + $0x84] sm:$0xf]
        %v478 = vld [vmem:[%s380 + $0x88] sm:$0xf]
        %v479 = vld [vmem:[%s380 + $0x8c] sm:$0xf]
        %v480 = vld [vmem:[%s380 + $0x90] sm:$0xf]
        %v481 = vld [vmem:[%s380 + $0x94] sm:$0xf]
        %v482 = vld [vmem:[%s380 + $0x98] sm:$0xf]
        %v483 = vld [vmem:[%s380 + $0x9c] sm:$0xf]
        %v484 = vld [vmem:[%s380 + $0xa0] sm:$0xf]
        %v485 = vld [vmem:[%s380 + $0xa4] sm:$0xf]
        %v486 = vld [vmem:[%s380 + $0xa8] sm:$0xf]
        %v487 = vld [vmem:[%s380 + $0xac] sm:$0xf]
        %v488 = vld [vmem:[%s380 + $0xb0] sm:$0xf]
        %v489 = vld [vmem:[%s380 + $0xb4] sm:$0xf]
        %v490 = vld [vmem:[%s380 + $0xb8] sm:$0xf]
        %v491 = vld [vmem:[%s380 + $0xbc] sm:$0xf]
        %v492 = vld [vmem:[%s380 + $0xc0] sm:$0xf]
        %v493 = vld [vmem:[%s380 + $0xc4] sm:$0xf]
        %v494 = vld [vmem:[%s380 + $0xc8] sm:$0xf]
        %v495 = vld [vmem:[%s380 + $0xcc] sm:$0xf]
        %v496 = vld [vmem:[%s380 + $0xd0] sm:$0xf]
        %v497 = vld [vmem:[%s380 + $0xd4] sm:$0xf]
        %v498 = vld [vmem:[%s380 + $0xd8] sm:$0xf]
        %v499 = vld [vmem:[%s380 + $0xdc] sm:$0xf]
        %v500 = vld [vmem:[%s380 + $0xe0] sm:$0xf]
        %v501 = vld [vmem:[%s380 + $0xe4] sm:$0xf]
        %v502 = vld [vmem:[%s380 + $0xe8] sm:$0xf]
        %v503 = vld [vmem:[%s380 + $0xec] sm:$0xf]
        %v504 = vld [vmem:[%s380 + $0xf0] sm:$0xf]
        %v505 = vld [vmem:[%s380 + $0xf4] sm:$0xf]
        %v506 = vld [vmem:[%s380 + $0xf8] sm:$0xf]
        %v507 = vld [vmem:[%s380 + $0xfc] sm:$0xf]
        %v508 = vld [vmem:[%s380 + $0x100] sm:$0xf]
        %v509 = vld [vmem:[%s380 + $0x104] sm:$0xf]
        %v510 = vld [vmem:[%s380 + $0x108] sm:$0xf]
        %v511 = vld [vmem:[%s380 + $0x10c] sm:$0xf]
        %v512 = vld [vmem:[%s380 + $0x110] sm:$0xf]
        %v513 = vld [vmem:[%s380 + $0x114] sm:$0xf]
        %v514 = vld [vmem:[%s380 + $0x118] sm:$0xf]
        %v515 = vld [vmem:[%s380 + $0x11c] sm:$0xf]
        %v516 = vld [vmem:[%s380 + $0x120] sm:$0xf]
        %v517 = vld [vmem:[%s380 + $0x124] sm:$0xf]
        %v518 = vld [vmem:[%s380 + $0x128] sm:$0xf]
        %v519 = vld [vmem:[%s380 + $0x12c] sm:$0xf]
        %v520 = vld [vmem:[%s380 + $0x130] sm:$0xf]
        %v521 = vld [vmem:[%s380 + $0x134] sm:$0xf]
        %v522 = vld [vmem:[%s380 + $0x138] sm:$0xf]
        %v523 = vld [vmem:[%s380 + $0x13c] sm:$0xf]
        %v524 = vld [vmem:[%s380 + $0x140] sm:$0xf]
        %v525 = vld [vmem:[%s380 + $0x144] sm:$0xf]
        %v526 = vld [vmem:[%s380 + $0x148] sm:$0xf]
        %v527 = vld [vmem:[%s380 + $0x14c] sm:$0xf]
        %v528 = vld [vmem:[%s380 + $0x150] sm:$0xf]
        %v529 = vld [vmem:[%s380 + $0x154] sm:$0xf]
        %v530 = vld [vmem:[%s380 + $0x158] sm:$0xf]
        %v531 = vld [vmem:[%s380 + $0x15c] sm:$0xf]
        %v532 = vld [vmem:[%s380 + $0x160] sm:$0xf]
        %v533 = vld [vmem:[%s380 + $0x164] sm:$0xf]
        %v534 = vld [vmem:[%s380 + $0x168] sm:$0xf]
        %v535 = vld [vmem:[%s380 + $0x16c] sm:$0xf]
        %v536 = vld [vmem:[%s380 + $0x170] sm:$0xf]
        %v537 = vld [vmem:[%s380 + $0x174] sm:$0xf]
        %v538 = vld [vmem:[%s380 + $0x178] sm:$0xf]
        %v539 = vld [vmem:[%s380 + $0x17c] sm:$0xf]
        %v540 = vld [vmem:[%s380 + $0x180] sm:$0xf]
        %v541 = vld [vmem:[%s380 + $0x184] sm:$0xf]
        %v542 = vld [vmem:[%s380 + $0x188] sm:$0xf]
        %v543 = vld [vmem:[%s380 + $0x18c] sm:$0xf]
        %v544 = vld [vmem:[%s380 + $0x190] sm:$0xf]
        %v545 = vld [vmem:[%s380 + $0x194] sm:$0xf]
        %v546 = vld [vmem:[%s380 + $0x198] sm:$0xf]
        %v547 = vld [vmem:[%s380 + $0x19c] sm:$0xf]
        %v548 = vld [vmem:[%s380 + $0x1a0] sm:$0xf]
        %v549 = vld [vmem:[%s380 + $0x1a4] sm:$0xf]
        %v550 = vld [vmem:[%s380 + $0x1a8] sm:$0xf]
        %v551 = vld [vmem:[%s380 + $0x1ac] sm:$0xf]
        %v552 = vld [vmem:[%s380 + $0x1b0] sm:$0xf]
        %v553 = vld [vmem:[%s380 + $0x1b4] sm:$0xf]
        %v554 = vld [vmem:[%s380 + $0x1b8] sm:$0xf]
        %v555 = vld [vmem:[%s380 + $0x1bc] sm:$0xf]
        %v556 = vld [vmem:[%s380 + $0x1c0] sm:$0xf]
        %v557 = vld [vmem:[%s380 + $0x1c4] sm:$0xf]
        %v558 = vld [vmem:[%s380 + $0x1c8] sm:$0xf]
        %v559 = vld [vmem:[%s380 + $0x1cc] sm:$0xf]
        %v560 = vld [vmem:[%s380 + $0x1d0] sm:$0xf]
        %v561 = vld [vmem:[%s380 + $0x1d4] sm:$0xf]
        %v562 = vld [vmem:[%s380 + $0x1d8] sm:$0xf]
        %v563 = vld [vmem:[%s380 + $0x1dc] sm:$0xf]
        %v564 = vld [vmem:[%s380 + $0x1e0] sm:$0xf]
        %v565 = vld [vmem:[%s380 + $0x1e4] sm:$0xf]
        %v566 = vld [vmem:[%s380 + $0x1e8] sm:$0xf]
        %v567 = vld [vmem:[%s380 + $0x1ec] sm:$0xf]
        %v568 = vld [vmem:[%s380 + $0x1f0] sm:$0xf]
        %v569 = vld [vmem:[%s380 + $0x1f4] sm:$0xf]
        %v570 = vld [vmem:[%s380 + $0x1f8] sm:$0xf]
        %v571 = vld [vmem:[%s380 + $0x1fc] sm:$0xf]
        %v576 = vunpack.c.l.b16 %v440
        %v577 = vunpack.c.h.b16 %v440
        %v578 = vunpack.c.l.b16 %v441
        %v579 = vunpack.c.h.b16 %v441
        %v580 = vunpack.c.l.b16 %v442
        %v581 = vunpack.c.h.b16 %v442
        %v582 = vunpack.c.l.b16 %v443
        %v583 = vunpack.c.h.b16 %v443
        %v584 = vpack.c.b16 %v576, %v576
        %v585 = vpack.c.b16 %v577, %v577
        %v586 = vpack.c.b16 %v578, %v578
        %v587 = vpack.c.b16 %v579, %v579
        %v588 = vpack.c.b16 %v580, %v580
        %v589 = vpack.c.b16 %v581, %v581
        %v590 = vpack.c.b16 %v582, %v582
        %v591 = vpack.c.b16 %v583, %v583
        %v728 = vunpack.c.l.b16 %v444
        %v729 = vunpack.c.l.b16 %v445
        %v730 = vunpack.c.l.b16 %v446
        %v731 = vunpack.c.l.b16 %v447
        %v732 = vunpack.c.l.b16 %v448
        %v733 = vunpack.c.l.b16 %v449
        %v734 = vunpack.c.l.b16 %v450
        %v735 = vunpack.c.l.b16 %v451
        %v736 = vunpack.c.l.b16 %v452
        %v737 = vunpack.c.l.b16 %v453
        %v738 = vunpack.c.l.b16 %v454
        %v739 = vunpack.c.l.b16 %v455
        %v740 = vunpack.c.l.b16 %v456
        %v741 = vunpack.c.l.b16 %v457
        %v742 = vunpack.c.l.b16 %v458
        %v743 = vunpack.c.l.b16 %v459
        %v744 = vunpack.c.l.b16 %v460
        %v745 = vunpack.c.l.b16 %v461
        %v746 = vunpack.c.l.b16 %v462
        %v747 = vunpack.c.l.b16 %v463
        %v748 = vunpack.c.l.b16 %v464
        %v749 = vunpack.c.l.b16 %v465
        %v750 = vunpack.c.l.b16 %v466
        %v751 = vunpack.c.l.b16 %v467
        %v752 = vunpack.c.l.b16 %v468
        %v753 = vunpack.c.l.b16 %v469
        %v754 = vunpack.c.l.b16 %v470
        %v755 = vunpack.c.l.b16 %v471
        %v756 = vunpack.c.l.b16 %v472
        %v757 = vunpack.c.l.b16 %v473
        %v758 = vunpack.c.l.b16 %v474
        %v759 = vunpack.c.l.b16 %v475
        %v760 = vunpack.c.l.b16 %v476
        %v761 = vunpack.c.l.b16 %v477
        %v762 = vunpack.c.l.b16 %v478
        %v763 = vunpack.c.l.b16 %v479
        %v764 = vunpack.c.l.b16 %v480
        %v765 = vunpack.c.l.b16 %v481
        %v766 = vunpack.c.l.b16 %v482
        %v767 = vunpack.c.l.b16 %v483
        %v768 = vunpack.c.l.b16 %v484
        %v769 = vunpack.c.l.b16 %v485
        %v770 = vunpack.c.l.b16 %v486
        %v771 = vunpack.c.l.b16 %v487
        %v772 = vunpack.c.l.b16 %v488
        %v773 = vunpack.c.l.b16 %v489
        %v774 = vunpack.c.l.b16 %v490
        %v775 = vunpack.c.l.b16 %v491
        %v776 = vunpack.c.l.b16 %v492
        %v777 = vunpack.c.l.b16 %v493
        %v778 = vunpack.c.l.b16 %v494
        %v779 = vunpack.c.l.b16 %v495
        %v780 = vunpack.c.l.b16 %v496
        %v781 = vunpack.c.l.b16 %v497
        %v782 = vunpack.c.l.b16 %v498
        %v783 = vunpack.c.l.b16 %v499
        %v784 = vunpack.c.l.b16 %v500
        %v785 = vunpack.c.l.b16 %v501
        %v786 = vunpack.c.l.b16 %v502
        %v787 = vunpack.c.l.b16 %v503
        %v788 = vunpack.c.l.b16 %v504
        %v789 = vunpack.c.l.b16 %v505
        %v790 = vunpack.c.l.b16 %v506
        %v791 = vunpack.c.l.b16 %v507
        %v792 = vunpack.c.l.b16 %v508
        %v793 = vunpack.c.l.b16 %v509
        %v794 = vunpack.c.l.b16 %v510
        %v795 = vunpack.c.l.b16 %v511
        %v796 = vunpack.c.l.b16 %v512
        %v797 = vunpack.c.l.b16 %v513
        %v798 = vunpack.c.l.b16 %v514
        %v799 = vunpack.c.l.b16 %v515
        %v800 = vunpack.c.l.b16 %v516
        %v801 = vunpack.c.l.b16 %v517
        %v802 = vunpack.c.l.b16 %v518
        %v803 = vunpack.c.l.b16 %v519
        %v804 = vunpack.c.l.b16 %v520
        %v805 = vunpack.c.l.b16 %v521
        %v806 = vunpack.c.l.b16 %v522
        %v807 = vunpack.c.l.b16 %v523
        %v808 = vunpack.c.l.b16 %v524
        %v809 = vunpack.c.l.b16 %v525
        %v810 = vunpack.c.l.b16 %v526
        %v811 = vunpack.c.l.b16 %v527
        %v812 = vunpack.c.l.b16 %v528
        %v813 = vunpack.c.l.b16 %v529
        %v814 = vunpack.c.l.b16 %v530
        %v815 = vunpack.c.l.b16 %v531
        %v816 = vunpack.c.l.b16 %v532
        %v817 = vunpack.c.l.b16 %v533
        %v818 = vunpack.c.l.b16 %v534
        %v819 = vunpack.c.l.b16 %v535
        %v820 = vunpack.c.l.b16 %v536
        %v821 = vunpack.c.l.b16 %v537
        %v822 = vunpack.c.l.b16 %v538
        %v823 = vunpack.c.l.b16 %v539
        %v824 = vunpack.c.l.b16 %v540
        %v825 = vunpack.c.l.b16 %v541
        %v826 = vunpack.c.l.b16 %v542
        %v827 = vunpack.c.l.b16 %v543
        %v828 = vunpack.c.l.b16 %v544
        %v829 = vunpack.c.l.b16 %v545
        %v830 = vunpack.c.l.b16 %v546
        %v831 = vunpack.c.l.b16 %v547
        %v832 = vunpack.c.l.b16 %v548
        %v833 = vunpack.c.l.b16 %v549
        %v834 = vunpack.c.l.b16 %v550
        %v835 = vunpack.c.l.b16 %v551
        %v836 = vunpack.c.l.b16 %v552
        %v837 = vunpack.c.l.b16 %v553
        %v838 = vunpack.c.l.b16 %v554
        %v839 = vunpack.c.l.b16 %v555
        %v840 = vunpack.c.l.b16 %v556
        %v841 = vunpack.c.l.b16 %v557
        %v842 = vunpack.c.l.b16 %v558
        %v843 = vunpack.c.l.b16 %v559
        %v844 = vunpack.c.l.b16 %v560
        %v845 = vunpack.c.l.b16 %v561
        %v846 = vunpack.c.l.b16 %v562
        %v847 = vunpack.c.l.b16 %v563
        %v848 = vunpack.c.l.b16 %v564
        %v849 = vunpack.c.l.b16 %v565
        %v850 = vunpack.c.l.b16 %v566
        %v851 = vunpack.c.l.b16 %v567
        %v852 = vunpack.c.l.b16 %v568
        %v853 = vunpack.c.l.b16 %v569
        %v854 = vunpack.c.l.b16 %v570
        %v855 = vunpack.c.l.b16 %v571
        %v856 = vpack.c.b16 %v729, %v728
        %v857 = vpack.c.b16 %v731, %v730
        %v858 = vpack.c.b16 %v733, %v732
        %v859 = vpack.c.b16 %v735, %v734
        %v860 = vpack.c.b16 %v737, %v736
        %v861 = vpack.c.b16 %v739, %v738
        %v862 = vpack.c.b16 %v741, %v740
        %v863 = vpack.c.b16 %v743, %v742
        %v864 = vpack.c.b16 %v745, %v744
        %v865 = vpack.c.b16 %v747, %v746
        %v866 = vpack.c.b16 %v749, %v748
        %v867 = vpack.c.b16 %v751, %v750
        %v868 = vpack.c.b16 %v753, %v752
        %v869 = vpack.c.b16 %v755, %v754
        %v870 = vpack.c.b16 %v757, %v756
        %v871 = vpack.c.b16 %v759, %v758
        %v872 = vpack.c.b16 %v761, %v760
        %v873 = vpack.c.b16 %v763, %v762
        %v874 = vpack.c.b16 %v765, %v764
        %v875 = vpack.c.b16 %v767, %v766
        %v876 = vpack.c.b16 %v769, %v768
        %v877 = vpack.c.b16 %v771, %v770
        %v878 = vpack.c.b16 %v773, %v772
        %v879 = vpack.c.b16 %v775, %v774
        %v880 = vpack.c.b16 %v777, %v776
        %v881 = vpack.c.b16 %v779, %v778
        %v882 = vpack.c.b16 %v781, %v780
        %v883 = vpack.c.b16 %v783, %v782
        %v884 = vpack.c.b16 %v785, %v784
        %v885 = vpack.c.b16 %v787, %v786
        %v886 = vpack.c.b16 %v789, %v788
        %v887 = vpack.c.b16 %v791, %v790
        %v888 = vpack.c.b16 %v793, %v792
        %v889 = vpack.c.b16 %v795, %v794
        %v890 = vpack.c.b16 %v797, %v796
        %v891 = vpack.c.b16 %v799, %v798
        %v892 = vpack.c.b16 %v801, %v800
        %v893 = vpack.c.b16 %v803, %v802
        %v894 = vpack.c.b16 %v805, %v804
        %v895 = vpack.c.b16 %v807, %v806
        %v896 = vpack.c.b16 %v809, %v808
        %v897 = vpack.c.b16 %v811, %v810
        %v898 = vpack.c.b16 %v813, %v812
        %v899 = vpack.c.b16 %v815, %v814
        %v900 = vpack.c.b16 %v817, %v816
        %v901 = vpack.c.b16 %v819, %v818
        %v902 = vpack.c.b16 %v821, %v820
        %v903 = vpack.c.b16 %v823, %v822
        %v904 = vpack.c.b16 %v825, %v824
        %v905 = vpack.c.b16 %v827, %v826
        %v906 = vpack.c.b16 %v829, %v828
        %v907 = vpack.c.b16 %v831, %v830
        %v908 = vpack.c.b16 %v833, %v832
        %v909 = vpack.c.b16 %v835, %v834
        %v910 = vpack.c.b16 %v837, %v836
        %v911 = vpack.c.b16 %v839, %v838
        %v912 = vpack.c.b16 %v841, %v840
        %v913 = vpack.c.b16 %v843, %v842
        %v914 = vpack.c.b16 %v845, %v844
        %v915 = vpack.c.b16 %v847, %v846
        %v916 = vpack.c.b16 %v849, %v848
        %v917 = vpack.c.b16 %v851, %v850
        %v918 = vpack.c.b16 %v853, %v852
        %v919 = vpack.c.b16 %v855, %v854
        %984 = vmatprep.subr.bf16.mxu0 0
        %985 = vmatpush1.bf16.msra.mxu0 %v863
        %986 = vmatprep.subr.bf16.mxu0 0
        %987 = vmatpush1.bf16.msra.mxu0 %v862
        %988 = vmatprep.subr.bf16.mxu0 0
        %989 = vmatpush1.bf16.msra.mxu0 %v861
        %990 = vmatprep.subr.bf16.mxu0 0
        %991 = vmatpush1.bf16.msra.mxu0 %v860
        %992 = vmatprep.subr.bf16.mxu0 0
        %993 = vmatpush1.bf16.msra.mxu0 %v859
        %994 = vmatprep.subr.bf16.mxu0 0
        %995 = vmatpush1.bf16.msra.mxu0 %v858
        %996 = vmatprep.subr.bf16.mxu0 0
        %997 = vmatpush1.bf16.msra.mxu0 %v857
        %998 = vmatprep.subr.bf16.mxu0 0
        %999 = vmatpush1.bf16.msra.mxu0 %v856
        %1000 = vmatprep.subr.bf16.mxu0 0
        %1001 = vmatpush2.bf16.msra.mxu0 %v871
        %1002 = vmatprep.subr.bf16.mxu0 0
        %1003 = vmatpush2.bf16.msra.mxu0 %v870
        %1004 = vmatprep.subr.bf16.mxu0 0
        %1005 = vmatpush2.bf16.msra.mxu0 %v869
        %1006 = vmatprep.subr.bf16.mxu0 0
        %1007 = vmatpush2.bf16.msra.mxu0 %v868
        %1008 = vmatprep.subr.bf16.mxu0 0
        %1009 = vmatpush2.bf16.msra.mxu0 %v867
        %1010 = vmatprep.subr.bf16.mxu0 0
        %1011 = vmatpush2.bf16.msra.mxu0 %v866
        %1012 = vmatprep.subr.bf16.mxu0 0
        %1013 = vmatpush2.bf16.msra.mxu0 %v865
        %1014 = vmatprep.subr.bf16.mxu0 0
        %1015 = vmatpush2.bf16.msra.mxu0 %v864
        %1016 = vmatprep.mubr.bf16.mxu0 %v585
        %1017 = vmatmul.mubr.bf16.gmra.mxu0 %v584
        %v1018 = vpop.f32.mrf.mxu0
        %v1019 = vadd.f32 0.0, %v1018
        %v1020 = vpop.f32.mrf.mxu0
        %v1021 = vpop.f32.mrf.mxu0
        %v1022 = vpop.f32.mrf.mxu0
        %1023 = vdwg.mxu0
        %1024 = vmatprep.subr.bf16.mxu0 0
        %1025 = vmatpush1.bf16.msra.mxu0 %v879
        %1026 = vmatprep.subr.bf16.mxu0 0
        %1027 = vmatpush1.bf16.msra.mxu0 %v878
        %1028 = vmatprep.subr.bf16.mxu0 0
        %1029 = vmatpush1.bf16.msra.mxu0 %v877
        %1030 = vmatprep.subr.bf16.mxu0 0
        %1031 = vmatpush1.bf16.msra.mxu0 %v876
        %1032 = vmatprep.subr.bf16.mxu0 0
        %1033 = vmatpush1.bf16.msra.mxu0 %v875
        %1034 = vmatprep.subr.bf16.mxu0 0
        %1035 = vmatpush1.bf16.msra.mxu0 %v874
        %1036 = vmatprep.subr.bf16.mxu0 0
        %1037 = vmatpush1.bf16.msra.mxu0 %v873
        %1038 = vmatprep.subr.bf16.mxu0 0
        %1039 = vmatpush1.bf16.msra.mxu0 %v872
        %1040 = vmatprep.subr.bf16.mxu0 0
        %1041 = vmatpush2.bf16.msra.mxu0 %v887
        %1042 = vmatprep.subr.bf16.mxu0 0
        %1043 = vmatpush2.bf16.msra.mxu0 %v886
        %1044 = vmatprep.subr.bf16.mxu0 0
        %1045 = vmatpush2.bf16.msra.mxu0 %v885
        %1046 = vmatprep.subr.bf16.mxu0 0
        %1047 = vmatpush2.bf16.msra.mxu0 %v884
        %1048 = vmatprep.subr.bf16.mxu0 0
        %1049 = vmatpush2.bf16.msra.mxu0 %v883
        %1050 = vmatprep.subr.bf16.mxu0 0
        %1051 = vmatpush2.bf16.msra.mxu0 %v882
        %1052 = vmatprep.subr.bf16.mxu0 0
        %1053 = vmatpush2.bf16.msra.mxu0 %v881
        %1054 = vmatprep.subr.bf16.mxu0 0
        %1055 = vmatpush2.bf16.msra.mxu0 %v880
        %1056 = vmatprep.mubr.bf16.mxu0 %v587
        %1057 = vmatmul.mubr.bf16.gmra.mxu0 %v586
        %v1058 = vpop.f32.mrf.mxu0
        %v1059 = vadd.f32 %v1019, %v1058
        %v1060 = vpop.f32.mrf.mxu0
        %v1061 = vpop.f32.mrf.mxu0
        %v1062 = vpop.f32.mrf.mxu0
        %1063 = vdwg.mxu0
        %1064 = vmatprep.subr.bf16.mxu0 0
        %1065 = vmatpush1.bf16.msra.mxu0 %v895
        %1066 = vmatprep.subr.bf16.mxu0 0
        %1067 = vmatpush1.bf16.msra.mxu0 %v894
        %1068 = vmatprep.subr.bf16.mxu0 0
        %1069 = vmatpush1.bf16.msra.mxu0 %v893
        %1070 = vmatprep.subr.bf16.mxu0 0
        %1071 = vmatpush1.bf16.msra.mxu0 %v892
        %1072 = vmatprep.subr.bf16.mxu0 0
        %1073 = vmatpush1.bf16.msra.mxu0 %v891
        %1074 = vmatprep.subr.bf16.mxu0 0
        %1075 = vmatpush1.bf16.msra.mxu0 %v890
        %1076 = vmatprep.subr.bf16.mxu0 0
        %1077 = vmatpush1.bf16.msra.mxu0 %v889
        %1078 = vmatprep.subr.bf16.mxu0 0
        %1079 = vmatpush1.bf16.msra.mxu0 %v888
        %1080 = vmatprep.subr.bf16.mxu0 0
        %1081 = vmatpush2.bf16.msra.mxu0 %v903
        %1082 = vmatprep.subr.bf16.mxu0 0
        %1083 = vmatpush2.bf16.msra.mxu0 %v902
        %1084 = vmatprep.subr.bf16.mxu0 0
        %1085 = vmatpush2.bf16.msra.mxu0 %v901
        %1086 = vmatprep.subr.bf16.mxu0 0
        %1087 = vmatpush2.bf16.msra.mxu0 %v900
        %1088 = vmatprep.subr.bf16.mxu0 0
        %1089 = vmatpush2.bf16.msra.mxu0 %v899
        %1090 = vmatprep.subr.bf16.mxu0 0
        %1091 = vmatpush2.bf16.msra.mxu0 %v898
        %1092 = vmatprep.subr.bf16.mxu0 0
        %1093 = vmatpush2.bf16.msra.mxu0 %v897
        %1094 = vmatprep.subr.bf16.mxu0 0
        %1095 = vmatpush2.bf16.msra.mxu0 %v896
        %1096 = vmatprep.mubr.bf16.mxu0 %v589
        %1097 = vmatmul.mubr.bf16.gmra.mxu0 %v588
        %v1098 = vpop.f32.mrf.mxu0
        %v1099 = vadd.f32 %v1059, %v1098
        %v1100 = vpop.f32.mrf.mxu0
        %v1101 = vpop.f32.mrf.mxu0
        %v1102 = vpop.f32.mrf.mxu0
        %1103 = vdwg.mxu0
        %1104 = vmatprep.subr.bf16.mxu0 0
        %1105 = vmatpush1.bf16.msra.mxu0 %v911
        %1106 = vmatprep.subr.bf16.mxu0 0
        %1107 = vmatpush1.bf16.msra.mxu0 %v910
        %1108 = vmatprep.subr.bf16.mxu0 0
        %1109 = vmatpush1.bf16.msra.mxu0 %v909
        %1110 = vmatprep.subr.bf16.mxu0 0
        %1111 = vmatpush1.bf16.msra.mxu0 %v908
        %1112 = vmatprep.subr.bf16.mxu0 0
        %1113 = vmatpush1.bf16.msra.mxu0 %v907
        %1114 = vmatprep.subr.bf16.mxu0 0
        %1115 = vmatpush1.bf16.msra.mxu0 %v906
        %1116 = vmatprep.subr.bf16.mxu0 0
        %1117 = vmatpush1.bf16.msra.mxu0 %v905
        %1118 = vmatprep.subr.bf16.mxu0 0
        %1119 = vmatpush1.bf16.msra.mxu0 %v904
        %1120 = vmatprep.subr.bf16.mxu0 0
        %1121 = vmatpush2.bf16.msra.mxu0 %v919
        %1122 = vmatprep.subr.bf16.mxu0 0
        %1123 = vmatpush2.bf16.msra.mxu0 %v918
        %1124 = vmatprep.subr.bf16.mxu0 0
        %1125 = vmatpush2.bf16.msra.mxu0 %v917
        %1126 = vmatprep.subr.bf16.mxu0 0
        %1127 = vmatpush2.bf16.msra.mxu0 %v916
        %1128 = vmatprep.subr.bf16.mxu0 0
        %1129 = vmatpush2.bf16.msra.mxu0 %v915
        %1130 = vmatprep.subr.bf16.mxu0 0
        %1131 = vmatpush2.bf16.msra.mxu0 %v914
        %1132 = vmatprep.subr.bf16.mxu0 0
        %1133 = vmatpush2.bf16.msra.mxu0 %v913
        %1134 = vmatprep.subr.bf16.mxu0 0
        %1135 = vmatpush2.bf16.msra.mxu0 %v912
        %1136 = vmatprep.mubr.bf16.mxu0 %v591
        %1137 = vmatmul.mubr.bf16.gmra.mxu0 %v590
        %v1138 = vpop.f32.mrf.mxu0
        %v1139 = vadd.f32 %v1099, %v1138
        %v1140 = vpop.f32.mrf.mxu0
        %v1141 = vpop.f32.mrf.mxu0
        %v1142 = vpop.f32.mrf.mxu0
        %1143 = vdwg.mxu0
        %v1144 = vadd.f32 %v439, %v1139
        %1145 = vst [vmem:[#allocation2] sm:$0xff] %v1144
        %p1146 = scmp.eq.s32.totalorder %s29, 2
        // Predicated region
        $region85: #{tpu_custom_call.1} parent=55 // pred_check
          %p1147 = pneg %p1146
        $region86: #{tpu_custom_call.1} parent=55 // pred_check_branch
          %1149 = sbr.rel (%p1147) target = $region88
        $region87: #{tpu_custom_call.1} parent=55 // pred_region
          %v1150 = vld [vmem:[#allocation2] sm:$0xff]
          %v1151 = vld [vmem:[%s2] sm:$0x1]
          %v1153 = vlaneseq
          %v1154 = vshrl.u32 %v1153, 7
          %v1155 = vsub.s32 0, %v1154
          %v1156 = vrot.slane %v1151, %v1155
          %v1158 = vadd.f32 %v1150, %v1156
          %v1159 = vmax.f32 %v1158, 0.0
          %v1160 = vld [vmem:[#allocation8] sm:$0xff]
          %v1161 = vmul.f32 %v1159, %v1160
          %v1162 = vld [vmem:[#allocation9] sm:$0xff]
          %v1163 = vld [vmem:[#allocation9 + $0x8] sm:$0xff]
          %v1164 = vld [vmem:[#allocation9 + $0x10] sm:$0xff]
          %v1165 = vld [vmem:[#allocation9 + $0x18] sm:$0xff]
          %v1166 = vld [vmem:[#allocation9 + $0x20] sm:$0xff]
          %v1167 = vld [vmem:[#allocation9 + $0x28] sm:$0xff]
          %v1168 = vld [vmem:[#allocation9 + $0x30] sm:$0xff]
          %v1169 = vld [vmem:[#allocation9 + $0x38] sm:$0xff]
          %v1170 = vld [vmem:[#allocation9 + $0x40] sm:$0xff]
          %v1171 = vld [vmem:[#allocation9 + $0x48] sm:$0xff]
          %v1172 = vld [vmem:[#allocation9 + $0x50] sm:$0xff]
          %v1173 = vld [vmem:[#allocation9 + $0x58] sm:$0xff]
          %v1174 = vld [vmem:[#allocation9 + $0x60] sm:$0xff]
          %v1175 = vld [vmem:[#allocation9 + $0x68] sm:$0xff]
          %v1176 = vld [vmem:[#allocation9 + $0x70] sm:$0xff]
          %v1177 = vld [vmem:[#allocation9 + $0x78] sm:$0xff]
          %v1178 = vld [vmem:[#allocation9 + $0x80] sm:$0xff]
          %v1179 = vld [vmem:[#allocation9 + $0x88] sm:$0xff]
          %v1180 = vld [vmem:[#allocation9 + $0x90] sm:$0xff]
          %v1181 = vld [vmem:[#allocation9 + $0x98] sm:$0xff]
          %v1182 = vld [vmem:[#allocation9 + $0xa0] sm:$0xff]
          %v1183 = vld [vmem:[#allocation9 + $0xa8] sm:$0xff]
          %v1184 = vld [vmem:[#allocation9 + $0xb0] sm:$0xff]
          %v1185 = vld [vmem:[#allocation9 + $0xb8] sm:$0xff]
          %v1186 = vld [vmem:[#allocation9 + $0xc0] sm:$0xff]
          %v1187 = vld [vmem:[#allocation9 + $0xc8] sm:$0xff]
          %v1188 = vld [vmem:[#allocation9 + $0xd0] sm:$0xff]
          %v1189 = vld [vmem:[#allocation9 + $0xd8] sm:$0xff]
          %v1190 = vld [vmem:[#allocation9 + $0xe0] sm:$0xff]
          %v1191 = vld [vmem:[#allocation9 + $0xe8] sm:$0xff]
          %v1192 = vld [vmem:[#allocation9 + $0xf0] sm:$0xff]
          %v1193 = vld [vmem:[#allocation9 + $0xf8] sm:$0xff]
          %v1194 = vld [vmem:[%s5] sm:$0x3]
          %v1196 = vlaneseq
          %v1197 = vshrl.u32 %v1196, 7
          %v1198 = vsub.s32 0, %v1197
          %v1199 = vrot.slane %v1194, %v1198
          %v1200 = vlaneseq
          %v1201 = vshrl.u32 %v1200, 7
          %v1202 = vsub.s32 1, %v1201
          %v1203 = vrot.slane %v1194, %v1202
          %1206 = vmatprep.subr.mxu0 %v1193
          %1207 = vmatpush1.msra.mxu0 %v1192
          %1208 = vmatprep.subr.mxu0 %v1191
          %1209 = vmatpush1.msra.mxu0 %v1190
          %1210 = vmatprep.subr.mxu0 %v1189
          %1211 = vmatpush1.msra.mxu0 %v1188
          %1212 = vmatprep.subr.mxu0 %v1187
          %1213 = vmatpush1.msra.mxu0 %v1186
          %1214 = vmatprep.subr.mxu0 %v1185
          %1215 = vmatpush1.msra.mxu0 %v1184
          %1216 = vmatprep.subr.mxu0 %v1183
          %1217 = vmatpush1.msra.mxu0 %v1182
          %1218 = vmatprep.subr.mxu0 %v1181
          %1219 = vmatpush1.msra.mxu0 %v1180
          %1220 = vmatprep.subr.mxu0 %v1179
          %1221 = vmatpush1.msra.mxu0 %v1178
          %1222 = vmatprep.subr.mxu0 %v1177
          %1223 = vmatpush1.msra.mxu0 %v1176
          %1224 = vmatprep.subr.mxu0 %v1175
          %1225 = vmatpush1.msra.mxu0 %v1174
          %1226 = vmatprep.subr.mxu0 %v1173
          %1227 = vmatpush1.msra.mxu0 %v1172
          %1228 = vmatprep.subr.mxu0 %v1171
          %1229 = vmatpush1.msra.mxu0 %v1170
          %1230 = vmatprep.subr.mxu0 %v1169
          %1231 = vmatpush1.msra.mxu0 %v1168
          %1232 = vmatprep.subr.mxu0 %v1167
          %1233 = vmatpush1.msra.mxu0 %v1166
          %1234 = vmatprep.subr.mxu0 %v1165
          %1235 = vmatpush1.msra.mxu0 %v1164
          %1236 = vmatprep.subr.mxu0 %v1163
          %1237 = vmatpush1.msra.mxu0 %v1162
          %1238 = vmatprep.subr.mxu0 0.0
          %1239 = vmatpush2.msra.mxu0 0.0
          %1240 = vmatprep.subr.mxu0 0.0
          %1241 = vmatpush2.msra.mxu0 0.0
          %1242 = vmatprep.subr.mxu0 0.0
          %1243 = vmatpush2.msra.mxu0 0.0
          %1244 = vmatprep.subr.mxu0 0.0
          %1245 = vmatpush2.msra.mxu0 0.0
          %1246 = vmatprep.subr.mxu0 0.0
          %1247 = vmatpush2.msra.mxu0 0.0
          %1248 = vmatprep.subr.mxu0 0.0
          %1249 = vmatpush2.msra.mxu0 0.0
          %1250 = vmatprep.subr.mxu0 0.0
          %1251 = vmatpush2.msra.mxu0 0.0
          %1252 = vmatprep.subr.mxu0 0.0
          %1253 = vmatpush2.msra.mxu0 0.0
          %1254 = vmatprep.subr.mxu0 0.0
          %1255 = vmatpush2.msra.mxu0 0.0
          %1256 = vmatprep.subr.mxu0 0.0
          %1257 = vmatpush2.msra.mxu0 0.0
          %1258 = vmatprep.subr.mxu0 0.0
          %1259 = vmatpush2.msra.mxu0 0.0
          %1260 = vmatprep.subr.mxu0 0.0
          %1261 = vmatpush2.msra.mxu0 0.0
          %1262 = vmatprep.subr.mxu0 0.0
          %1263 = vmatpush2.msra.mxu0 0.0
          %1264 = vmatprep.subr.mxu0 0.0
          %1265 = vmatpush2.msra.mxu0 0.0
          %1266 = vmatprep.subr.mxu0 0.0
          %1267 = vmatpush2.msra.mxu0 0.0
          %1268 = vmatprep.subr.mxu0 0.0
          %1269 = vmatpush2.msra.mxu0 0.0
          %1270 = vmatprep.mubr.f32.mxu0 0.0
          %1271 = vmatmul.mubr.f32.gmra.mxu0 %v1161
          %v1272 = vpop.f32.mrf.mxu0
          %v1273 = vadd.f32 %v1199, %v1272
          %v1274 = vpop.f32.mrf.mxu0
          %v1275 = vadd.f32 %v1203, %v1274
          %1276 = vdwg.mxu0
          %v1277 = vmax.f32 %v1273, 0.0
          %v1278 = vmax.f32 %v1275, 0.0
          %v1279 = vld [vmem:[#allocation11] sm:$0xff]
          %v1280 = vld [vmem:[#allocation11 + $0x8] sm:$0xff]
          %v1281 = vmul.f32 %v1277, %v1279
          %v1282 = vmul.f32 %v1278, %v1280
          %v1283 = vld [vmem:[#allocation12] sm:$0xff]
          %v1284 = vld [vmem:[#allocation12 + $0x8] sm:$0xff]
          %v1285 = vld [vmem:[#allocation12 + $0x10] sm:$0xff]
          %v1286 = vld [vmem:[#allocation12 + $0x18] sm:$0xff]
          %v1287 = vld [vmem:[#allocation12 + $0x20] sm:$0xff]
          %v1288 = vld [vmem:[#allocation12 + $0x28] sm:$0xff]
          %v1289 = vld [vmem:[#allocation12 + $0x30] sm:$0xff]
          %v1290 = vld [vmem:[#allocation12 + $0x38] sm:$0xff]
          %v1291 = vld [vmem:[#allocation12 + $0x40] sm:$0xff]
          %v1292 = vld [vmem:[#allocation12 + $0x48] sm:$0xff]
          %v1293 = vld [vmem:[#allocation12 + $0x50] sm:$0xff]
          %v1294 = vld [vmem:[#allocation12 + $0x58] sm:$0xff]
          %v1295 = vld [vmem:[#allocation12 + $0x60] sm:$0xff]
          %v1296 = vld [vmem:[#allocation12 + $0x68] sm:$0xff]
          %v1297 = vld [vmem:[#allocation12 + $0x70] sm:$0xff]
          %v1298 = vld [vmem:[#allocation12 + $0x78] sm:$0xff]
          %v1299 = vld [vmem:[#allocation12 + $0x80] sm:$0xff]
          %v1300 = vld [vmem:[#allocation12 + $0x88] sm:$0xff]
          %v1301 = vld [vmem:[#allocation12 + $0x90] sm:$0xff]
          %v1302 = vld [vmem:[#allocation12 + $0x98] sm:$0xff]
          %v1303 = vld [vmem:[#allocation12 + $0xa0] sm:$0xff]
          %v1304 = vld [vmem:[#allocation12 + $0xa8] sm:$0xff]
          %v1305 = vld [vmem:[#allocation12 + $0xb0] sm:$0xff]
          %v1306 = vld [vmem:[#allocation12 + $0xb8] sm:$0xff]
          %v1307 = vld [vmem:[#allocation12 + $0xc0] sm:$0xff]
          %v1308 = vld [vmem:[#allocation12 + $0xc8] sm:$0xff]
          %v1309 = vld [vmem:[#allocation12 + $0xd0] sm:$0xff]
          %v1310 = vld [vmem:[#allocation12 + $0xd8] sm:$0xff]
          %v1311 = vld [vmem:[#allocation12 + $0xe0] sm:$0xff]
          %v1312 = vld [vmem:[#allocation12 + $0xe8] sm:$0xff]
          %v1313 = vld [vmem:[#allocation12 + $0xf0] sm:$0xff]
          %v1314 = vld [vmem:[#allocation12 + $0xf8] sm:$0xff]
          %v1315 = vld [vmem:[#allocation12 + $0x100] sm:$0xff]
          %v1316 = vld [vmem:[#allocation12 + $0x108] sm:$0xff]
          %v1317 = vld [vmem:[#allocation12 + $0x110] sm:$0xff]
          %v1318 = vld [vmem:[#allocation12 + $0x118] sm:$0xff]
          %v1319 = vld [vmem:[#allocation12 + $0x120] sm:$0xff]
          %v1320 = vld [vmem:[#allocation12 + $0x128] sm:$0xff]
          %v1321 = vld [vmem:[#allocation12 + $0x130] sm:$0xff]
          %v1322 = vld [vmem:[#allocation12 + $0x138] sm:$0xff]
          %v1323 = vld [vmem:[#allocation12 + $0x140] sm:$0xff]
          %v1324 = vld [vmem:[#allocation12 + $0x148] sm:$0xff]
          %v1325 = vld [vmem:[#allocation12 + $0x150] sm:$0xff]
          %v1326 = vld [vmem:[#allocation12 + $0x158] sm:$0xff]
          %v1327 = vld [vmem:[#allocation12 + $0x160] sm:$0xff]
          %v1328 = vld [vmem:[#allocation12 + $0x168] sm:$0xff]
          %v1329 = vld [vmem:[#allocation12 + $0x170] sm:$0xff]
          %v1330 = vld [vmem:[#allocation12 + $0x178] sm:$0xff]
          %v1331 = vld [vmem:[#allocation12 + $0x180] sm:$0xff]
          %v1332 = vld [vmem:[#allocation12 + $0x188] sm:$0xff]
          %v1333 = vld [vmem:[#allocation12 + $0x190] sm:$0xff]
          %v1334 = vld [vmem:[#allocation12 + $0x198] sm:$0xff]
          %v1335 = vld [vmem:[#allocation12 + $0x1a0] sm:$0xff]
          %v1336 = vld [vmem:[#allocation12 + $0x1a8] sm:$0xff]
          %v1337 = vld [vmem:[#allocation12 + $0x1b0] sm:$0xff]
          %v1338 = vld [vmem:[#allocation12 + $0x1b8] sm:$0xff]
          %v1339 = vld [vmem:[#allocation12 + $0x1c0] sm:$0xff]
          %v1340 = vld [vmem:[#allocation12 + $0x1c8] sm:$0xff]
          %v1341 = vld [vmem:[#allocation12 + $0x1d0] sm:$0xff]
          %v1342 = vld [vmem:[#allocation12 + $0x1d8] sm:$0xff]
          %v1343 = vld [vmem:[#allocation12 + $0x1e0] sm:$0xff]
          %v1344 = vld [vmem:[#allocation12 + $0x1e8] sm:$0xff]
          %v1345 = vld [vmem:[#allocation12 + $0x1f0] sm:$0xff]
          %v1346 = vld [vmem:[#allocation12 + $0x1f8] sm:$0xff]
          %v1347 = vld [vmem:[%s8] sm:$0x3]
          %v1349 = vlaneseq
          %v1350 = vshrl.u32 %v1349, 7
          %v1351 = vsub.s32 0, %v1350
          %v1352 = vrot.slane %v1347, %v1351
          %v1353 = vlaneseq
          %v1354 = vshrl.u32 %v1353, 7
          %v1355 = vsub.s32 1, %v1354
          %v1356 = vrot.slane %v1347, %v1355
          %1359 = vmatprep.subr.mxu0 %v1314
          %1360 = vmatpush1.msra.mxu0 %v1313
          %1361 = vmatprep.subr.mxu0 %v1312
          %1362 = vmatpush1.msra.mxu0 %v1311
          %1363 = vmatprep.subr.mxu0 %v1310
          %1364 = vmatpush1.msra.mxu0 %v1309
          %1365 = vmatprep.subr.mxu0 %v1308
          %1366 = vmatpush1.msra.mxu0 %v1307
          %1367 = vmatprep.subr.mxu0 %v1306
          %1368 = vmatpush1.msra.mxu0 %v1305
          %1369 = vmatprep.subr.mxu0 %v1304
          %1370 = vmatpush1.msra.mxu0 %v1303
          %1371 = vmatprep.subr.mxu0 %v1302
          %1372 = vmatpush1.msra.mxu0 %v1301
          %1373 = vmatprep.subr.mxu0 %v1300
          %1374 = vmatpush1.msra.mxu0 %v1299
          %1375 = vmatprep.subr.mxu0 %v1298
          %1376 = vmatpush1.msra.mxu0 %v1297
          %1377 = vmatprep.subr.mxu0 %v1296
          %1378 = vmatpush1.msra.mxu0 %v1295
          %1379 = vmatprep.subr.mxu0 %v1294
          %1380 = vmatpush1.msra.mxu0 %v1293
          %1381 = vmatprep.subr.mxu0 %v1292
          %1382 = vmatpush1.msra.mxu0 %v1291
          %1383 = vmatprep.subr.mxu0 %v1290
          %1384 = vmatpush1.msra.mxu0 %v1289
          %1385 = vmatprep.subr.mxu0 %v1288
          %1386 = vmatpush1.msra.mxu0 %v1287
          %1387 = vmatprep.subr.mxu0 %v1286
          %1388 = vmatpush1.msra.mxu0 %v1285
          %1389 = vmatprep.subr.mxu0 %v1284
          %1390 = vmatpush1.msra.mxu0 %v1283
          %1391 = vmatprep.subr.mxu0 %v1346
          %1392 = vmatpush2.msra.mxu0 %v1345
          %1393 = vmatprep.subr.mxu0 %v1344
          %1394 = vmatpush2.msra.mxu0 %v1343
          %1395 = vmatprep.subr.mxu0 %v1342
          %1396 = vmatpush2.msra.mxu0 %v1341
          %1397 = vmatprep.subr.mxu0 %v1340
          %1398 = vmatpush2.msra.mxu0 %v1339
          %1399 = vmatprep.subr.mxu0 %v1338
          %1400 = vmatpush2.msra.mxu0 %v1337
          %1401 = vmatprep.subr.mxu0 %v1336
          %1402 = vmatpush2.msra.mxu0 %v1335
          %1403 = vmatprep.subr.mxu0 %v1334
          %1404 = vmatpush2.msra.mxu0 %v1333
          %1405 = vmatprep.subr.mxu0 %v1332
          %1406 = vmatpush2.msra.mxu0 %v1331
          %1407 = vmatprep.subr.mxu0 %v1330
          %1408 = vmatpush2.msra.mxu0 %v1329
          %1409 = vmatprep.subr.mxu0 %v1328
          %1410 = vmatpush2.msra.mxu0 %v1327
          %1411 = vmatprep.subr.mxu0 %v1326
          %1412 = vmatpush2.msra.mxu0 %v1325
          %1413 = vmatprep.subr.mxu0 %v1324
          %1414 = vmatpush2.msra.mxu0 %v1323
          %1415 = vmatprep.subr.mxu0 %v1322
          %1416 = vmatpush2.msra.mxu0 %v1321
          %1417 = vmatprep.subr.mxu0 %v1320
          %1418 = vmatpush2.msra.mxu0 %v1319
          %1419 = vmatprep.subr.mxu0 %v1318
          %1420 = vmatpush2.msra.mxu0 %v1317
          %1421 = vmatprep.subr.mxu0 %v1316
          %1422 = vmatpush2.msra.mxu0 %v1315
          %1423 = vmatprep.mubr.f32.mxu0 %v1282
          %1424 = vmatmul.mubr.f32.gmra.mxu0 %v1281
          %v1425 = vpop.f32.mrf.mxu0
          %v1426 = vadd.f32 %v1352, %v1425
          %v1427 = vpop.f32.mrf.mxu0
          %v1428 = vadd.f32 %v1356, %v1427
          %1429 = vdwg.mxu0
          %1430 = vst [vmem:[#allocation14] sm:$0xff] %v1426
          %1431 = vst [vmem:[#allocation14 + $0x8] sm:$0xff] %v1428
        $region88: #{tpu_custom_call.1} parent=55 // pred_fallthru
          _
        // Predicated region
        $region89: #{tpu_custom_call.1} parent=55 // pred_check
          %p1432 = pneg %p241
        $region90: #{tpu_custom_call.1} parent=55 // pred_check_branch
          %1434 = sbr.rel (%p1432) target = $region92
        $region91: #{tpu_custom_call.1} parent=55 // pred_region
          %s1436 = ssub.s32 256, 256
          %1437 = vsyncadd [#allocation5], %s1436
          %s1439 = sshll.u32 [#allocation14], 4
          %s1440 = int_to_ptr.vmem [resolvable:$true] %s1439
          %1442 = dma.vmem_to_hbm [thread:$0]  %s1440, 256, %s9, [#allocation5]
        $region92: #{tpu_custom_call.1} parent=55 // pred_fallthru
          _
        // Predicated region
        $region93: #{tpu_custom_call.1} parent=55 // pred_check
          %p1443 = pneg %p241
        $region94: #{tpu_custom_call.1} parent=55 // pred_check_branch
          %1445 = sbr.rel (%p1443) target = $region96
        $region95: #{tpu_custom_call.1} parent=55 // pred_region
          %1446 = dma.done [#allocation5], 256
        $region96: #{tpu_custom_call.1} parent=55 // pred_fallthru
          _
      $region56: #{tpu_custom_call.1} parent=5 // pred_fallthru
        _
      %p1447 = scmp.le.s32.totalorder 2, %s24
      // Predicated region
      $region97: #{tpu_custom_call.1} parent=5 // pred_check
        %p1448 = pneg %p1447
      $region98: #{tpu_custom_call.1} parent=5 // pred_check_branch
        %1450 = sbr.rel (%p1448) target = $region100
      $region99: #{tpu_custom_call.1} parent=5 // pred_region
        %s1451 = ssub.s32 %s24, 2
      $region100: #{tpu_custom_call.1} parent=5 // pred_fallthru
        _
    $region6: #{tpu_custom_call.1} parent=1 // loop_footer
      %s28 = sadd.s32 1, %s24
    $region7: #{tpu_custom_call.1} parent=1 // loop_footer_branch
      %23 = sbr.rel target = $region3
    $region8: #{tpu_custom_call.1} parent=1 // loop_exit
      _
    %1452 = vsyncpa [#allocation4], 1
    %s1453 = scalar_lea.sflag [#allocation4], 1
    %1454 = vsyncpa %s1453, 1
    %1455 = vsyncpa [#allocation7], 1
    %s1456 = scalar_lea.sflag [#allocation7], 1
    %1457 = vsyncpa %s1456, 1
    %1458 = vsyncpa [#allocation10], 1
    %1459 = vsyncpa [#allocation13], 1
    %1460 = vsyncpa [#allocation5], 1
    %s1461 = scalar_lea.sflag [#allocation5], 1
    %1462 = vsyncpa %s1461, 1

</llo_original>
